<compile_context>
chip_gen: v7x
topology: tpu7x:2x2x1
jax: 0.10.0
libtpu: 0.0.40
codegen_flags: <defaults>
</compile_context>

<pallas_src>
import functools

import jax
import jax.numpy as jnp
from jax.experimental import pallas as pl
from jax.experimental.pallas import tpu as pltpu

F_PAD = 128  # padded feature width (lane-dense)


def _sage3_kernel(a_ref, dinv_ref, x_ref,
                  w1_ref, b1_ref, w2_ref, b2_ref, w3_ref, b3_ref, o_ref):
    """Fused 3-layer SAGEConv('mean') forward for a block of B_BLK subgraphs.

    a_ref   : [B_BLK, N, N]      bf16  binary adjacency (resident for all 3 layers)
    dinv_ref: [B_BLK, N, 1]      f32   1 / max(deg, 1)
    x_ref   : [B_BLK, N, F_PAD]  bf16  zero-padded input features
    w*_ref  : [2*F_PAD, F_PAD]   bf16  vertically stacked [[W_self], [W_neigh]]
    b*_ref  : [1, F_PAD]         f32   zero-padded bias
    o_ref   : [B_BLK, N, F_PAD]  f32   padded output (lane-dense store)
    """
    bb, n, f = x_ref.shape
    a = a_ref[...]          # read once, reused by all 3 layers
    dinv = dinv_ref[...]    # f32 per-row mean scale

    def layer(h_bf16, w_ref, b_ref):
        # DGL 'mean' aggregation: per-graph A_bin @ h (f32 accumulation on MXU),
        # then exact f32 1/deg rescale on the VPU.
        agg = jnp.einsum("bij,bjf->bif", a, h_bf16,
                         preferred_element_type=jnp.float32)
        agg = (agg * dinv).astype(jnp.bfloat16)
        # Both linears fused into ONE MXU call:
        #   [h | mean(h)] @ [[W_self], [W_neigh]]  ->  h @ W_self + mean(h) @ W_neigh
        hc = jnp.concatenate([h_bf16, agg], axis=-1).reshape(bb * n, 2 * f)
        out = jnp.dot(hc, w_ref[...], preferred_element_type=jnp.float32)
        return out + b_ref[...]                      # f32 [bb*n, f]

    h = x_ref[...]                                   # bf16
    for w_ref, b_ref in ((w1_ref, b1_ref), (w2_ref, b2_ref)):
        out = layer(h, w_ref, b_ref)
        # ReLU (+ eval-mode dropout = identity); keep inter-layer activations bf16.
        h = jnp.maximum(out, 0.0).astype(jnp.bfloat16).reshape(bb, n, f)
    o_ref[...] = layer(h, w3_ref, b3_ref).reshape(bb, n, f)   # f32 writeback


def _pad2(a, rows, cols):
    out = jnp.zeros((rows, cols), a.dtype)
    return out.at[: a.shape[0], : a.shape[1]].set(a)


def pack_params(params, f_pad=F_PAD):
    """Pad each layer to f_pad and stack [[W_self],[W_neigh]] -> [2*f_pad, f_pad] bf16."""
    packed = []
    for w_self, w_neigh, bias in params:
        w_stack = jnp.concatenate(
            [_pad2(w_self, f_pad, f_pad), _pad2(w_neigh, f_pad, f_pad)], axis=0
        ).astype(jnp.bfloat16)
        b = _pad2(bias, 1, f_pad).astype(jnp.float32)
        packed.append((w_stack, b))
    return packed


@functools.partial(jax.jit, static_argnames=("n_classes", "b_blk"))
def sage_forward(adj_bin, inv_deg, x, params, *, n_classes, b_blk=4):
    """Fused 3-layer SAGE forward (eval mode).

    adj_bin: [B, N, N] f32  binary adjacency per subgraph (0/1, no self loops)
    inv_deg: [B, N, 1] f32  1 / max(deg, 1)
    x      : [B, N, in_feats] f32 node features
    returns [B, N, n_classes] f32
    """
    B, N, _ = adj_bin.shape
    assert B % b_blk == 0, (B, b_blk)

    x_pad = jnp.zeros((B, N, F_PAD), jnp.bfloat16).at[:, :, : x.shape[-1]].set(
        x.astype(jnp.bfloat16))
    a_bf16 = adj_bin.astype(jnp.bfloat16)            # binary -> bf16 is exact
    (w1, b1), (w2, b2), (w3, b3) = pack_params(params)

    w_spec = pl.BlockSpec((2 * F_PAD, F_PAD), lambda g: (0, 0))
    b_spec = pl.BlockSpec((1, F_PAD), lambda g: (0, 0))
    bnf_spec = pl.BlockSpec((b_blk, N, F_PAD), lambda g: (g, 0, 0))

    out = pl.pallas_call(
        _sage3_kernel,
        out_shape=jax.ShapeDtypeStruct((B, N, F_PAD), jnp.float32),
        grid=(B // b_blk,),
        in_specs=[
            pl.BlockSpec((b_blk, N, N), lambda g: (g, 0, 0)),   # A binary (bf16)
            pl.BlockSpec((b_blk, N, 1), lambda g: (g, 0, 0)),   # 1/deg (f32)
            bnf_spec,                                           # x (bf16, padded)
            w_spec, b_spec,                                     # layer 1
            w_spec, b_spec,                                     # layer 2
            w_spec, b_spec,                                     # layer 3
        ],
        out_specs=bnf_spec,
        compiler_params=pltpu.CompilerParams(
            dimension_semantics=("parallel",),                  # v7x: shard over 2 TCs
            vmem_limit_bytes=64 * 1024 * 1024,                  # explicit budget (v7x)
        ),
    )(a_bf16, inv_deg, x_pad, w1, b1, w2, b2, w3, b3)
    return out[:, :, :n_classes]


def init_sage_params(key, in_feats, n_hidden, n_classes):
    """Deterministic Xavier-ish init for the 3 SAGEConv layers (f32, real dims)."""
    dims = [(in_feats, n_hidden), (n_hidden, n_hidden), (n_hidden, n_classes)]
    params = []
    for i, (fi, fo) in enumerate(dims):
        k_self, k_neigh, k_bias = jax.random.split(jax.random.fold_in(key, i), 3)
        scale = jnp.sqrt(2.0 / (fi + fo)).astype(jnp.float32)
        w_self = jax.random.normal(k_self, (fi, fo), jnp.float32) * scale
        w_neigh = jax.random.normal(k_neigh, (fi, fo), jnp.float32) * scale
        bias = jax.random.normal(k_bias, (1, fo), jnp.float32) * 0.1
        params.append((w_self, w_neigh, bias))
    return params


def build_graph(key, batch, n_nodes, edge_prob=0.2):
    """Random dense graphs -> binary adjacency + f32 inverse degree, per subgraph."""
    adj = jax.random.bernoulli(key, edge_prob, (batch, n_nodes, n_nodes))
    adj = adj.astype(jnp.float32) * (1.0 - jnp.eye(n_nodes, dtype=jnp.float32))
    deg = adj.sum(axis=-1, keepdims=True)
    inv_deg = 1.0 / jnp.clip(deg, 1.0, None)
    return adj, inv_deg


def sage_reference(adj_bin, inv_deg, x, params):
    """Pure-JAX reference in the DGL order ((A@h)*1/deg) @ W_neigh + h @ W_self + b,
    with operands rounded to bf16 at the same points as the kernel."""
    rb = lambda v: v.astype(jnp.bfloat16).astype(jnp.float32)
    a = adj_bin                                   # 0/1, bf16-exact
    h = rb(x)
    n_layers = len(params)
    out = h
    for l, (w_self, w_neigh, bias) in enumerate(params):
        agg = rb(jnp.einsum("bij,bjf->bif", a, h) * inv_deg)
        out = (jnp.einsum("bif,fo->bio", h, rb(w_self))
               + jnp.einsum("bif,fo->bio", agg, rb(w_neigh))
               + bias)
        if l != n_layers - 1:
            h = rb(jnp.maximum(out, 0.0))         # ReLU; eval-mode dropout = identity
    return out


if __name__ == "__main__":
    key = jax.random.PRNGKey(0)
    k_graph, k_feat, k_param = jax.random.split(key, 3)

    B = 8            # batch of cluster subgraphs (B_BLK=4 -> grid of 2 parallel steps)
    N = 64           # nodes per cluster subgraph
    IN_FEATS = 16
    N_HIDDEN = 32
    N_CLASSES = 8

    adj_bin, inv_deg = build_graph(k_graph, B, N)
    x = jax.random.normal(k_feat, (B, N, IN_FEATS), jnp.float32)
    params = init_sage_params(k_param, IN_FEATS, N_HIDDEN, N_CLASSES)

    out = sage_forward(adj_bin, inv_deg, x, params, n_classes=N_CLASSES, b_blk=4)
    out = jax.block_until_ready(out)

    ref = sage_reference(adj_bin, inv_deg, x, params)

    assert out.shape == (B, N, N_CLASSES), out.shape
    assert out.dtype == jnp.float32, out.dtype
    assert bool(jnp.all(jnp.isfinite(out)))
    assert bool(jnp.allclose(out, ref, rtol=5e-2, atol=5e-2)), (
        float(jnp.max(jnp.abs(out - ref))))
    print("KERNEL_OK")
</pallas_src>

<mosaic_0001>
module attributes {stable_mosaic.version = 11 : i64} {
  func.func @_sage3_kernel(%arg0: i32, %arg1: memref<4x64x64xbf16, #tpu.memory_space<vmem>>, %arg2: memref<4x64x1xf32, #tpu.memory_space<vmem>>, %arg3: memref<4x64x128xbf16, #tpu.memory_space<vmem>>, %arg4: memref<256x128xbf16, #tpu.memory_space<vmem>>, %arg5: memref<1x128xf32, #tpu.memory_space<vmem>>, %arg6: memref<256x128xbf16, #tpu.memory_space<vmem>>, %arg7: memref<1x128xf32, #tpu.memory_space<vmem>>, %arg8: memref<256x128xbf16, #tpu.memory_space<vmem>>, %arg9: memref<1x128xf32, #tpu.memory_space<vmem>>, %arg10: memref<4x64x128xf32, #tpu.memory_space<vmem>>) attributes {dimension_semantics = [#tpu.dimension_semantics<parallel>], iteration_bounds = array<i64: 2>, scalar_prefetch = 0 : i64, scratch_operands = 0 : i64, tpu.core_type = #tpu.core_type<tc>, window_params = [{transform_indices = @transform_0, window_bounds = array<i64: 4, 64, 64>}, {transform_indices = @transform_1, window_bounds = array<i64: 4, 64, 1>}, {transform_indices = @transform_2, window_bounds = array<i64: 4, 64, 128>}, {pipeline_mode = #tpu.pipeline_mode<synchronous>, transform_indices = @transform_3, window_bounds = array<i64: 256, 128>}, {pipeline_mode = #tpu.pipeline_mode<synchronous>, transform_indices = @transform_4, window_bounds = array<i64: 1, 128>}, {pipeline_mode = #tpu.pipeline_mode<synchronous>, transform_indices = @transform_5, window_bounds = array<i64: 256, 128>}, {pipeline_mode = #tpu.pipeline_mode<synchronous>, transform_indices = @transform_6, window_bounds = array<i64: 1, 128>}, {pipeline_mode = #tpu.pipeline_mode<synchronous>, transform_indices = @transform_7, window_bounds = array<i64: 256, 128>}, {pipeline_mode = #tpu.pipeline_mode<synchronous>, transform_indices = @transform_8, window_bounds = array<i64: 1, 128>}, {transform_indices = @transform_9, window_bounds = array<i64: 4, 64, 128>}]} {
    %c0 = arith.constant 0 : index
    %c0_0 = arith.constant 0 : index
    %c0_1 = arith.constant 0 : index
    %0 = vector.load %arg1[%c0, %c0_0, %c0_1] : memref<4x64x64xbf16, #tpu.memory_space<vmem>>, vector<4x64x64xbf16>
    %c0_2 = arith.constant 0 : index
    %c0_3 = arith.constant 0 : index
    %c0_4 = arith.constant 0 : index
    %1 = vector.load %arg2[%c0_2, %c0_3, %c0_4] : memref<4x64x1xf32, #tpu.memory_space<vmem>>, vector<4x64x1xf32>
    %c0_5 = arith.constant 0 : index
    %c0_6 = arith.constant 0 : index
    %c0_7 = arith.constant 0 : index
    %2 = vector.load %arg3[%c0_5, %c0_6, %c0_7] : memref<4x64x128xbf16, #tpu.memory_space<vmem>>, vector<4x64x128xbf16>
    "tpu.trace_start"() <{level = 10 : i32, message = "bij,bjf->bif"}> : () -> ()
    %cst = arith.constant dense<0.000000e+00> : vector<4x64x128xf32>
    %3 = tpu.matmul %0, %2, %cst {dimension_numbers = #tpu.dot_dimension_numbers<[2], [1], [1], [2], [0, 0, 0, 1, 1, 2], [0], [0]>} : vector<4x64x64xbf16>, vector<4x64x128xbf16>, vector<4x64x128xf32> -> vector<4x64x128xf32>
    "tpu.trace_stop"() : () -> ()
    %4 = vector.broadcast %1 : vector<4x64x1xf32> to vector<4x64x128xf32>
    %5 = arith.mulf %3, %4 : vector<4x64x128xf32>
    %6 = arith.truncf %5 : vector<4x64x128xf32> to vector<4x64x128xbf16>
    %7 = tpu.concatenate %2, %6 in 2 : vector<4x64x128xbf16>, vector<4x64x128xbf16> -> vector<4x64x256xbf16>
    %8 = vector.shape_cast %7 : vector<4x64x256xbf16> to vector<256x256xbf16>
    %c0_8 = arith.constant 0 : index
    %c0_9 = arith.constant 0 : index
    %9 = vector.load %arg4[%c0_8, %c0_9] : memref<256x128xbf16, #tpu.memory_space<vmem>>, vector<256x128xbf16>
    %cst_10 = arith.constant dense<0.000000e+00> : vector<256x128xf32>
    %10 = tpu.matmul %8, %9, %cst_10 {dimension_numbers = #tpu.dot_dimension_numbers<[1], [0], [0], [1], [0, 0, 1, 1], [], []>} : vector<256x256xbf16>, vector<256x128xbf16>, vector<256x128xf32> -> vector<256x128xf32>
    %c0_11 = arith.constant 0 : index
    %c0_12 = arith.constant 0 : index
    %11 = vector.load %arg5[%c0_11, %c0_12] : memref<1x128xf32, #tpu.memory_space<vmem>>, vector<1x128xf32>
    %12 = vector.broadcast %11 : vector<1x128xf32> to vector<256x128xf32>
    %13 = arith.addf %10, %12 : vector<256x128xf32>
    %cst_13 = arith.constant 0.000000e+00 : f32
    %14 = vector.broadcast %cst_13 : f32 to vector<256x128xf32>
    %15 = arith.maximumf %13, %14 : vector<256x128xf32>
    %16 = arith.truncf %15 : vector<256x128xf32> to vector<256x128xbf16>
    %17 = vector.shape_cast %16 : vector<256x128xbf16> to vector<4x64x128xbf16>
    "tpu.trace_start"() <{level = 10 : i32, message = "bij,bjf->bif"}> : () -> ()
    %cst_14 = arith.constant dense<0.000000e+00> : vector<4x64x128xf32>
    %18 = tpu.matmul %0, %17, %cst_14 {dimension_numbers = #tpu.dot_dimension_numbers<[2], [1], [1], [2], [0, 0, 0, 1, 1, 2], [0], [0]>} : vector<4x64x64xbf16>, vector<4x64x128xbf16>, vector<4x64x128xf32> -> vector<4x64x128xf32>
    "tpu.trace_stop"() : () -> ()
    %19 = vector.broadcast %1 : vector<4x64x1xf32> to vector<4x64x128xf32>
    %20 = arith.mulf %18, %19 : vector<4x64x128xf32>
    %21 = arith.truncf %20 : vector<4x64x128xf32> to vector<4x64x128xbf16>
    %22 = tpu.concatenate %17, %21 in 2 : vector<4x64x128xbf16>, vector<4x64x128xbf16> -> vector<4x64x256xbf16>
    %23 = vector.shape_cast %22 : vector<4x64x256xbf16> to vector<256x256xbf16>
    %c0_15 = arith.constant 0 : index
    %c0_16 = arith.constant 0 : index
    %24 = vector.load %arg6[%c0_15, %c0_16] : memref<256x128xbf16, #tpu.memory_space<vmem>>, vector<256x128xbf16>
    %cst_17 = arith.constant dense<0.000000e+00> : vector<256x128xf32>
    %25 = tpu.matmul %23, %24, %cst_17 {dimension_numbers = #tpu.dot_dimension_numbers<[1], [0], [0], [1], [0, 0, 1, 1], [], []>} : vector<256x256xbf16>, vector<256x128xbf16>, vector<256x128xf32> -> vector<256x128xf32>
    %c0_18 = arith.constant 0 : index
    %c0_19 = arith.constant 0 : index
    %26 = vector.load %arg7[%c0_18, %c0_19] : memref<1x128xf32, #tpu.memory_space<vmem>>, vector<1x128xf32>
    %27 = vector.broadcast %26 : vector<1x128xf32> to vector<256x128xf32>
    %28 = arith.addf %25, %27 : vector<256x128xf32>
    %cst_20 = arith.constant 0.000000e+00 : f32
    %29 = vector.broadcast %cst_20 : f32 to vector<256x128xf32>
    %30 = arith.maximumf %28, %29 : vector<256x128xf32>
    %31 = arith.truncf %30 : vector<256x128xf32> to vector<256x128xbf16>
    %32 = vector.shape_cast %31 : vector<256x128xbf16> to vector<4x64x128xbf16>
    "tpu.trace_start"() <{level = 10 : i32, message = "bij,bjf->bif"}> : () -> ()
    %cst_21 = arith.constant dense<0.000000e+00> : vector<4x64x128xf32>
    %33 = tpu.matmul %0, %32, %cst_21 {dimension_numbers = #tpu.dot_dimension_numbers<[2], [1], [1], [2], [0, 0, 0, 1, 1, 2], [0], [0]>} : vector<4x64x64xbf16>, vector<4x64x128xbf16>, vector<4x64x128xf32> -> vector<4x64x128xf32>
    "tpu.trace_stop"() : () -> ()
    %34 = vector.broadcast %1 : vector<4x64x1xf32> to vector<4x64x128xf32>
    %35 = arith.mulf %33, %34 : vector<4x64x128xf32>
    %36 = arith.truncf %35 : vector<4x64x128xf32> to vector<4x64x128xbf16>
    %37 = tpu.concatenate %32, %36 in 2 : vector<4x64x128xbf16>, vector<4x64x128xbf16> -> vector<4x64x256xbf16>
    %38 = vector.shape_cast %37 : vector<4x64x256xbf16> to vector<256x256xbf16>
    %c0_22 = arith.constant 0 : index
    %c0_23 = arith.constant 0 : index
    %39 = vector.load %arg8[%c0_22, %c0_23] : memref<256x128xbf16, #tpu.memory_space<vmem>>, vector<256x128xbf16>
    %cst_24 = arith.constant dense<0.000000e+00> : vector<256x128xf32>
    %40 = tpu.matmul %38, %39, %cst_24 {dimension_numbers = #tpu.dot_dimension_numbers<[1], [0], [0], [1], [0, 0, 1, 1], [], []>} : vector<256x256xbf16>, vector<256x128xbf16>, vector<256x128xf32> -> vector<256x128xf32>
    %c0_25 = arith.constant 0 : index
    %c0_26 = arith.constant 0 : index
    %41 = vector.load %arg9[%c0_25, %c0_26] : memref<1x128xf32, #tpu.memory_space<vmem>>, vector<1x128xf32>
    %42 = vector.broadcast %41 : vector<1x128xf32> to vector<256x128xf32>
    %43 = arith.addf %40, %42 : vector<256x128xf32>
    %44 = vector.shape_cast %43 : vector<256x128xf32> to vector<4x64x128xf32>
    %c0_27 = arith.constant 0 : index
    %c0_28 = arith.constant 0 : index
    %c0_29 = arith.constant 0 : index
    %45 = vector.load %arg10[%c0_27, %c0_28, %c0_29] : memref<4x64x128xf32, #tpu.memory_space<vmem>>, vector<4x64x128xf32>
    tpu.vector_store %arg10[%c0_27, %c0_28, %c0_29], %44 {strides = array<i32>} : memref<4x64x128xf32, #tpu.memory_space<vmem>>, vector<4x64x128xf32>,
    return
  }
  func.func @transform_0(%arg0: i32) -> (i32, i32, i32) {
    %c0_i32 = arith.constant 0 : i32
    %c0_i32_0 = arith.constant 0 : i32
    %c0_i32_1 = arith.constant 0 : i32
    return %arg0, %c0_i32, %c0_i32_0 : i32, i32, i32
  }
  func.func @transform_1(%arg0: i32) -> (i32, i32, i32) {
    %c0_i32 = arith.constant 0 : i32
    %c0_i32_0 = arith.constant 0 : i32
    %c0_i32_1 = arith.constant 0 : i32
    return %arg0, %c0_i32, %c0_i32_0 : i32, i32, i32
  }
  func.func @transform_2(%arg0: i32) -> (i32, i32, i32) {
    %c0_i32 = arith.constant 0 : i32
    %c0_i32_0 = arith.constant 0 : i32
    %c0_i32_1 = arith.constant 0 : i32
    return %arg0, %c0_i32, %c0_i32_0 : i32, i32, i32
  }
  func.func @transform_3(%arg0: i32) -> (i32, i32) {
    %c0_i32 = arith.constant 0 : i32
    %c0_i32_0 = arith.constant 0 : i32
    %c0_i32_1 = arith.constant 0 : i32
    return %c0_i32, %c0_i32_0 : i32, i32
  }
  func.func @transform_4(%arg0: i32) -> (i32, i32) {
    %c0_i32 = arith.constant 0 : i32
    %c0_i32_0 = arith.constant 0 : i32
    %c0_i32_1 = arith.constant 0 : i32
    return %c0_i32, %c0_i32_0 : i32, i32
  }
  func.func @transform_5(%arg0: i32) -> (i32, i32) {
    %c0_i32 = arith.constant 0 : i32
    %c0_i32_0 = arith.constant 0 : i32
    %c0_i32_1 = arith.constant 0 : i32
    return %c0_i32, %c0_i32_0 : i32, i32
  }
  func.func @transform_6(%arg0: i32) -> (i32, i32) {
    %c0_i32 = arith.constant 0 : i32
    %c0_i32_0 = arith.constant 0 : i32
    %c0_i32_1 = arith.constant 0 : i32
    return %c0_i32, %c0_i32_0 : i32, i32
  }
  func.func @transform_7(%arg0: i32) -> (i32, i32) {
    %c0_i32 = arith.constant 0 : i32
    %c0_i32_0 = arith.constant 0 : i32
    %c0_i32_1 = arith.constant 0 : i32
    return %c0_i32, %c0_i32_0 : i32, i32
  }
  func.func @transform_8(%arg0: i32) -> (i32, i32) {
    %c0_i32 = arith.constant 0 : i32
    %c0_i32_0 = arith.constant 0 : i32
    %c0_i32_1 = arith.constant 0 : i32
    return %c0_i32, %c0_i32_0 : i32, i32
  }
  func.func @transform_9(%arg0: i32) -> (i32, i32, i32) {
    %c0_i32 = arith.constant 0 : i32
    %c0_i32_0 = arith.constant 0 : i32
    %c0_i32_1 = arith.constant 0 : i32
    return %arg0, %c0_i32, %c0_i32_0 : i32, i32, i32
  }
}

</mosaic_0001>

<llo_original>
// kernel: sage_forward.1
$region0: #{sage_forward.1}
  #allocation0 [shape = 'u32[]', space=smem, size = 0x4, offset = 0x4, fixed_abs, tag = 'smem constant byte address 0x4 - core index']
  #allocation1 [shape = 'u32[144,128]{1,0:T(1,128)}', space=vmem, size = 0x12000, scoped, tag = 'internal scratch']
  %s0 = inlined_call_operand.hbm [shape: bf16[8,64,64], index: 0, kind: input, shape index: {}]
  %s1 = inlined_call_operand.hbm [shape: f32[8,64,1], index: 1, kind: input, shape index: {}]
  %s2 = inlined_call_operand.hbm [shape: bf16[8,64,128], index: 2, kind: input, shape index: {}]
  %s3 = inlined_call_operand.hbm [shape: bf16[256,128], index: 3, kind: input, shape index: {}]
  %s4 = inlined_call_operand.hbm [shape: f32[1,128], index: 4, kind: input, shape index: {}]
  %s5 = inlined_call_operand.hbm [shape: bf16[256,128], index: 5, kind: input, shape index: {}]
  %s6 = inlined_call_operand.hbm [shape: f32[1,128], index: 6, kind: input, shape index: {}]
  %s7 = inlined_call_operand.hbm [shape: bf16[256,128], index: 7, kind: input, shape index: {}]
  %s8 = inlined_call_operand.hbm [shape: f32[1,128], index: 8, kind: input, shape index: {}]
  %s9 = inlined_call_operand.hbm [shape: f32[8,64,128], index: 9, kind: output, shape index: {}]
  %s10 = sld [smem:[#allocation0]]
  $region105: #{sage_forward.1} parent=0
    _
  %s12 = ssub.s32 1, %s10
  %s13 = scalar_select 0, %s12, %s10
  $region1: #{sage_forward.1} parent=0
    #allocation2 [shape = 'u8[131072]{0}', space=vmem, size = 0x20000, scoped, tag = 'input window, operand 0']
    #allocation3 [shape = 's32[2]{0}', space=sflag, size = 0x8, scoped, tag = 'scoped memory for sage_forward.1']
    #allocation4 [shape = 's32[2]{0}', space=sflag, size = 0x8, scoped, tag = 'scoped memory for sage_forward.1']
    #allocation5 [shape = 'u8[262144]{0}', space=vmem, size = 0x40000, scoped, tag = 'input window, operand 1']
    #allocation6 [shape = 's32[2]{0}', space=sflag, size = 0x8, scoped, tag = 'scoped memory for sage_forward.1']
    #allocation7 [shape = 'u8[131072]{0}', space=vmem, size = 0x20000, scoped, tag = 'input window, operand 2']
    #allocation8 [shape = 'u8[65536]{0}', space=vmem, size = 0x10000, scoped, tag = 'input window, operand 3, single buffered']
    #allocation9 [shape = 's32[1]{0}', space=sflag, size = 0x4, scoped, tag = 'scoped memory for sage_forward.1']
    #allocation10 [shape = 'u8[512]{0}', space=vmem, size = 0x400, scoped, tag = 'input window, operand 4, single buffered']
    #allocation11 [shape = 'u8[65536]{0}', space=vmem, size = 0x10000, scoped, tag = 'input window, operand 5, single buffered']
    #allocation12 [shape = 's32[1]{0}', space=sflag, size = 0x4, scoped, tag = 'scoped memory for sage_forward.1']
    #allocation13 [shape = 'u8[512]{0}', space=vmem, size = 0x400, scoped, tag = 'input window, operand 6, single buffered']
    #allocation14 [shape = 'u8[65536]{0}', space=vmem, size = 0x10000, scoped, tag = 'input window, operand 7, single buffered']
    #allocation15 [shape = 's32[1]{0}', space=sflag, size = 0x4, scoped, tag = 'scoped memory for sage_forward.1']
    #allocation16 [shape = 'u8[512]{0}', space=vmem, size = 0x400, scoped, tag = 'input window, operand 8, single buffered']
    #allocation17 [shape = 'u8[262144]{0}', space=vmem, size = 0x40000, scoped, tag = 'output window, operand 0']
    %14 = vsyncpa [#allocation3], 0
    %s15 = scalar_lea.sflag [#allocation3], 1
    %16 = vsyncpa %s15, 0
    %17 = vsyncpa [#allocation6], 0
    %s18 = scalar_lea.sflag [#allocation6], 1
    %19 = vsyncpa %s18, 0
    %20 = vsyncpa [#allocation9], 0
    %21 = vsyncpa [#allocation12], 0
    %22 = vsyncpa [#allocation15], 0
    %23 = vsyncpa [#allocation4], 0
    %s24 = scalar_lea.sflag [#allocation4], 1
    %25 = vsyncpa %s24, 0
    loop: start=0, step=1, limit=4
    $region2: #{sage_forward.1} parent=1 // loop_pre_header
      _
    $region3: #{sage_forward.1} parent=1 // loop_header
      %s27 = sphi 0, %s31
      %p28 = scmp.ge.s32.totalorder %s27, 4
      %s37 = sphi 0, %s39
      %s40 = sphi 0, %s37
      %s41 = sphi 0, %s40
      %s57 = sphi 0, %s41
      %s63 = sphi 0, %s65
      %s66 = sphi 0, %s63
      %s67 = sphi 0, %s66
      %s83 = sphi 0, %s67
      %s89 = sphi 0, %s91
      %s92 = sphi 0, %s89
      %s93 = sphi 0, %s92
      %s109 = sphi 0, %s93
      %s113 = sphi 0, %s113
      %s115 = sphi 0, %s113
      %s116 = sphi 0, %s115
      %s130 = sphi 0, %s116
      %s134 = sphi 0, %s134
      %s136 = sphi 0, %s134
      %s137 = sphi 0, %s136
      %s151 = sphi 0, %s137
      %s155 = sphi 0, %s155
      %s157 = sphi 0, %s155
      %s158 = sphi 0, %s157
      %s172 = sphi 0, %s158
      %s176 = sphi 0, %s176
      %s178 = sphi 0, %s176
      %s179 = sphi 0, %s178
      %s193 = sphi 0, %s179
      %s197 = sphi 0, %s197
      %s199 = sphi 0, %s197
      %s200 = sphi 0, %s199
      %s214 = sphi 0, %s200
      %s218 = sphi 0, %s218
      %s220 = sphi 0, %s218
      %s221 = sphi 0, %s220
      %s235 = sphi 0, %s221
      %s241 = sphi 0, %s243
      %s244 = sphi 0, %s241
      %s245 = sphi 0, %s244
      %s261 = sphi 0, %s245
    $region4: #{sage_forward.1} parent=1 // loop_header_branch
      %30 = sbr.rel (%p28) target = $region8
    $region5: #{sage_forward.1} parent=1 // loop_body
      %s32 = ssub.s32 %s27, 1
      %s33 = ssub.s32 %s27, 2
      %s34 = sadd.s32 %s27, 1
      %s35 = ssub.s32 %s27, %s34
      %p36 = scmp.eq.s32.totalorder %s35, 0
      %s38 = sadd.s32 %s37, 1
      %s39 = scalar_select %p36, %s37, %s38
      %p42 = pneg %p36
      %p43 = scmp.eq.s32.totalorder %s27, 1
      %p44 = por %p42, %p43
      %p45 = scmp.ne.s32.totalorder %s37, %s40
      %p46 = scmp.eq.s32.totalorder %s27, 0
      %p47 = por %p45, %p46
      %p48 = scmp.ne.s32.totalorder %s37, %s40
      %p49 = scmp.eq.s32.totalorder %s32, 1
      %p50 = por %p48, %p49
      %p51 = scmp.ne.s32.totalorder %s40, %s41
      %p52 = scmp.eq.s32.totalorder %s32, 0
      %p53 = por %p51, %p52
      %p54 = scmp.ne.s32.totalorder %s40, %s41
      %p55 = scmp.eq.s32.totalorder %s33, 1
      %p56 = por %p54, %p55
      %p58 = scmp.ne.s32.totalorder %s41, %s57
      %p59 = scmp.eq.s32.totalorder %s33, 0
      %p60 = por %p58, %p59
      %s61 = ssub.s32 %s27, %s34
      %p62 = scmp.eq.s32.totalorder %s61, 0
      %s64 = sadd.s32 %s63, 1
      %s65 = scalar_select %p62, %s63, %s64
      %p68 = pneg %p62
      %p69 = scmp.eq.s32.totalorder %s27, 1
      %p70 = por %p68, %p69
      %p71 = scmp.ne.s32.totalorder %s63, %s66
      %p72 = scmp.eq.s32.totalorder %s27, 0
      %p73 = por %p71, %p72
      %p74 = scmp.ne.s32.totalorder %s63, %s66
      %p75 = scmp.eq.s32.totalorder %s32, 1
      %p76 = por %p74, %p75
      %p77 = scmp.ne.s32.totalorder %s66, %s67
      %p78 = scmp.eq.s32.totalorder %s32, 0
      %p79 = por %p77, %p78
      %p80 = scmp.ne.s32.totalorder %s66, %s67
      %p81 = scmp.eq.s32.totalorder %s33, 1
      %p82 = por %p80, %p81
      %p84 = scmp.ne.s32.totalorder %s67, %s83
      %p85 = scmp.eq.s32.totalorder %s33, 0
      %p86 = por %p84, %p85
      %s87 = ssub.s32 %s27, %s34
      %p88 = scmp.eq.s32.totalorder %s87, 0
      %s90 = sadd.s32 %s89, 1
      %s91 = scalar_select %p88, %s89, %s90
      %p94 = pneg %p88
      %p95 = scmp.eq.s32.totalorder %s27, 1
      %p96 = por %p94, %p95
      %p97 = scmp.ne.s32.totalorder %s89, %s92
      %p98 = scmp.eq.s32.totalorder %s27, 0
      %p99 = por %p97, %p98
      %p100 = scmp.ne.s32.totalorder %s89, %s92
      %p101 = scmp.eq.s32.totalorder %s32, 1
      %p102 = por %p100, %p101
      %p103 = scmp.ne.s32.totalorder %s92, %s93
      %p104 = scmp.eq.s32.totalorder %s32, 0
      %p105 = por %p103, %p104
      %p106 = scmp.ne.s32.totalorder %s92, %s93
      %p107 = scmp.eq.s32.totalorder %s33, 1
      %p108 = por %p106, %p107
      %p110 = scmp.ne.s32.totalorder %s93, %s109
      %p111 = scmp.eq.s32.totalorder %s33, 0
      %p112 = por %p110, %p111
      %s114 = sadd.s32 %s113, 1
      %p117 = scmp.eq.s32.totalorder %s27, 1
      %p118 = scmp.ne.s32.totalorder %s113, %s115
      %p119 = scmp.eq.s32.totalorder %s27, 0
      %p120 = por %p118, %p119
      %p121 = scmp.ne.s32.totalorder %s113, %s115
      %p122 = scmp.eq.s32.totalorder %s32, 1
      %p123 = por %p121, %p122
      %p124 = scmp.ne.s32.totalorder %s115, %s116
      %p125 = scmp.eq.s32.totalorder %s32, 0
      %p126 = por %p124, %p125
      %p127 = scmp.ne.s32.totalorder %s115, %s116
      %p128 = scmp.eq.s32.totalorder %s33, 1
      %p129 = por %p127, %p128
      %p131 = scmp.ne.s32.totalorder %s116, %s130
      %p132 = scmp.eq.s32.totalorder %s33, 0
      %p133 = por %p131, %p132
      %s135 = sadd.s32 %s134, 1
      %p138 = scmp.eq.s32.totalorder %s27, 1
      %p139 = scmp.ne.s32.totalorder %s134, %s136
      %p140 = scmp.eq.s32.totalorder %s27, 0
      %p141 = por %p139, %p140
      %p142 = scmp.ne.s32.totalorder %s134, %s136
      %p143 = scmp.eq.s32.totalorder %s32, 1
      %p144 = por %p142, %p143
      %p145 = scmp.ne.s32.totalorder %s136, %s137
      %p146 = scmp.eq.s32.totalorder %s32, 0
      %p147 = por %p145, %p146
      %p148 = scmp.ne.s32.totalorder %s136, %s137
      %p149 = scmp.eq.s32.totalorder %s33, 1
      %p150 = por %p148, %p149
      %p152 = scmp.ne.s32.totalorder %s137, %s151
      %p153 = scmp.eq.s32.totalorder %s33, 0
      %p154 = por %p152, %p153
      %s156 = sadd.s32 %s155, 1
      %p159 = scmp.eq.s32.totalorder %s27, 1
      %p160 = scmp.ne.s32.totalorder %s155, %s157
      %p161 = scmp.eq.s32.totalorder %s27, 0
      %p162 = por %p160, %p161
      %p163 = scmp.ne.s32.totalorder %s155, %s157
      %p164 = scmp.eq.s32.totalorder %s32, 1
      %p165 = por %p163, %p164
      %p166 = scmp.ne.s32.totalorder %s157, %s158
      %p167 = scmp.eq.s32.totalorder %s32, 0
      %p168 = por %p166, %p167
      %p169 = scmp.ne.s32.totalorder %s157, %s158
      %p170 = scmp.eq.s32.totalorder %s33, 1
      %p171 = por %p169, %p170
      %p173 = scmp.ne.s32.totalorder %s158, %s172
      %p174 = scmp.eq.s32.totalorder %s33, 0
      %p175 = por %p173, %p174
      %s177 = sadd.s32 %s176, 1
      %p180 = scmp.eq.s32.totalorder %s27, 1
      %p181 = scmp.ne.s32.totalorder %s176, %s178
      %p182 = scmp.eq.s32.totalorder %s27, 0
      %p183 = por %p181, %p182
      %p184 = scmp.ne.s32.totalorder %s176, %s178
      %p185 = scmp.eq.s32.totalorder %s32, 1
      %p186 = por %p184, %p185
      %p187 = scmp.ne.s32.totalorder %s178, %s179
      %p188 = scmp.eq.s32.totalorder %s32, 0
      %p189 = por %p187, %p188
      %p190 = scmp.ne.s32.totalorder %s178, %s179
      %p191 = scmp.eq.s32.totalorder %s33, 1
      %p192 = por %p190, %p191
      %p194 = scmp.ne.s32.totalorder %s179, %s193
      %p195 = scmp.eq.s32.totalorder %s33, 0
      %p196 = por %p194, %p195
      %s198 = sadd.s32 %s197, 1
      %p201 = scmp.eq.s32.totalorder %s27, 1
      %p202 = scmp.ne.s32.totalorder %s197, %s199
      %p203 = scmp.eq.s32.totalorder %s27, 0
      %p204 = por %p202, %p203
      %p205 = scmp.ne.s32.totalorder %s197, %s199
      %p206 = scmp.eq.s32.totalorder %s32, 1
      %p207 = por %p205, %p206
      %p208 = scmp.ne.s32.totalorder %s199, %s200
      %p209 = scmp.eq.s32.totalorder %s32, 0
      %p210 = por %p208, %p209
      %p211 = scmp.ne.s32.totalorder %s199, %s200
      %p212 = scmp.eq.s32.totalorder %s33, 1
      %p213 = por %p211, %p212
      %p215 = scmp.ne.s32.totalorder %s200, %s214
      %p216 = scmp.eq.s32.totalorder %s33, 0
      %p217 = por %p215, %p216
      %s219 = sadd.s32 %s218, 1
      %p222 = scmp.eq.s32.totalorder %s27, 1
      %p223 = scmp.ne.s32.totalorder %s218, %s220
      %p224 = scmp.eq.s32.totalorder %s27, 0
      %p225 = por %p223, %p224
      %p226 = scmp.ne.s32.totalorder %s218, %s220
      %p227 = scmp.eq.s32.totalorder %s32, 1
      %p228 = por %p226, %p227
      %p229 = scmp.ne.s32.totalorder %s220, %s221
      %p230 = scmp.eq.s32.totalorder %s32, 0
      %p231 = por %p229, %p230
      %p232 = scmp.ne.s32.totalorder %s220, %s221
      %p233 = scmp.eq.s32.totalorder %s33, 1
      %p234 = por %p232, %p233
      %p236 = scmp.ne.s32.totalorder %s221, %s235
      %p237 = scmp.eq.s32.totalorder %s33, 0
      %p238 = por %p236, %p237
      %s239 = ssub.s32 %s27, %s34
      %p240 = scmp.eq.s32.totalorder %s239, 0
      %s242 = sadd.s32 %s241, 1
      %s243 = scalar_select %p240, %s241, %s242
      %p246 = pneg %p240
      %p247 = scmp.eq.s32.totalorder %s27, 1
      %p248 = por %p246, %p247
      %p249 = scmp.ne.s32.totalorder %s241, %s244
      %p250 = scmp.eq.s32.totalorder %s27, 0
      %p251 = por %p249, %p250
      %p252 = scmp.ne.s32.totalorder %s241, %s244
      %p253 = scmp.eq.s32.totalorder %s32, 1
      %p254 = por %p252, %p253
      %p255 = scmp.ne.s32.totalorder %s244, %s245
      %p256 = scmp.eq.s32.totalorder %s32, 0
      %p257 = por %p255, %p256
      %p258 = scmp.ne.s32.totalorder %s244, %s245
      %p259 = scmp.eq.s32.totalorder %s33, 1
      %p260 = por %p258, %p259
      %p262 = scmp.ne.s32.totalorder %s245, %s261
      %p263 = scmp.eq.s32.totalorder %s33, 0
      %p264 = por %p262, %p263
      %p265 = scmp.le.s32.totalorder 1, %s27
      %p266 = scmp.lt.s32.totalorder %s27, 3
      %p267 = pnand %p265, %p266
      %p268 = pneg %p267
      // Predicated region
      $region9: #{sage_forward.1} parent=5 // pred_check
        _
      $region10: #{sage_forward.1} parent=5 // pred_check_branch
        %270 = sbr.rel (%p267) target = $region12
      $region11: #{sage_forward.1} parent=5 // pred_region
        %s271 = ssub.s32 %s27, 1
        // Predicated region
        $region13: #{sage_forward.1} parent=11 // pred_check
          %p272 = pneg %p126
        $region14: #{sage_forward.1} parent=11 // pred_check_branch
          %274 = sbr.rel (%p272) target = $region16
        $region15: #{sage_forward.1} parent=11 // pred_region
          %s276 = ssub.s32 2048, 2048
          %277 = vsyncadd [#allocation9], %s276
          %s278 = sshll.u32 [#allocation8], 4
          %s279 = int_to_ptr.vmem [resolvable:$true] %s278
          %284 = dma.hbm_to_vmem [thread:$0]  %s3, 2048, %s279, [#allocation9], 64, 64, 4
        $region16: #{sage_forward.1} parent=11 // pred_fallthru
          _
        // Predicated region
        $region17: #{sage_forward.1} parent=11 // pred_check
          %p285 = pneg %p147
        $region18: #{sage_forward.1} parent=11 // pred_check_branch
          %287 = sbr.rel (%p285) target = $region20
        $region19: #{sage_forward.1} parent=11 // pred_region
          %s289 = ssub.s32 16, 16
          %290 = vsyncadd [#allocation9], %s289
          %s292 = sshll.u32 [#allocation10], 4
          %s293 = int_to_ptr.vmem [resolvable:$true] %s292
          %295 = dma.hbm_to_vmem [thread:$0]  %s4, 16, %s293, [#allocation9]
        $region20: #{sage_forward.1} parent=11 // pred_fallthru
          _
        // Predicated region
        $region21: #{sage_forward.1} parent=11 // pred_check
          %p296 = pneg %p168
        $region22: #{sage_forward.1} parent=11 // pred_check_branch
          %298 = sbr.rel (%p296) target = $region24
        $region23: #{sage_forward.1} parent=11 // pred_region
          %s300 = ssub.s32 2048, 2048
          %301 = vsyncadd [#allocation12], %s300
          %s302 = sshll.u32 [#allocation11], 4
          %s303 = int_to_ptr.vmem [resolvable:$true] %s302
          %308 = dma.hbm_to_vmem [thread:$0]  %s5, 2048, %s303, [#allocation12], 64, 64, 4
        $region24: #{sage_forward.1} parent=11 // pred_fallthru
          _
        // Predicated region
        $region25: #{sage_forward.1} parent=11 // pred_check
          %p309 = pneg %p189
        $region26: #{sage_forward.1} parent=11 // pred_check_branch
          %311 = sbr.rel (%p309) target = $region28
        $region27: #{sage_forward.1} parent=11 // pred_region
          %s313 = ssub.s32 16, 16
          %314 = vsyncadd [#allocation12], %s313
          %s316 = sshll.u32 [#allocation13], 4
          %s317 = int_to_ptr.vmem [resolvable:$true] %s316
          %319 = dma.hbm_to_vmem [thread:$0]  %s6, 16, %s317, [#allocation12]
        $region28: #{sage_forward.1} parent=11 // pred_fallthru
          _
        // Predicated region
        $region29: #{sage_forward.1} parent=11 // pred_check
          %p320 = pneg %p210
        $region30: #{sage_forward.1} parent=11 // pred_check_branch
          %322 = sbr.rel (%p320) target = $region32
        $region31: #{sage_forward.1} parent=11 // pred_region
          %s324 = ssub.s32 2048, 2048
          %325 = vsyncadd [#allocation15], %s324
          %s326 = sshll.u32 [#allocation14], 4
          %s327 = int_to_ptr.vmem [resolvable:$true] %s326
          %332 = dma.hbm_to_vmem [thread:$0]  %s7, 2048, %s327, [#allocation15], 64, 64, 4
        $region32: #{sage_forward.1} parent=11 // pred_fallthru
          _
        // Predicated region
        $region33: #{sage_forward.1} parent=11 // pred_check
          %p333 = pneg %p231
        $region34: #{sage_forward.1} parent=11 // pred_check_branch
          %335 = sbr.rel (%p333) target = $region36
        $region35: #{sage_forward.1} parent=11 // pred_region
          %s337 = ssub.s32 16, 16
          %338 = vsyncadd [#allocation15], %s337
          %s340 = sshll.u32 [#allocation16], 4
          %s341 = int_to_ptr.vmem [resolvable:$true] %s340
          %343 = dma.hbm_to_vmem [thread:$0]  %s8, 16, %s341, [#allocation15]
        $region36: #{sage_forward.1} parent=11 // pred_fallthru
          _
      $region12: #{sage_forward.1} parent=5 // pred_fallthru
        _
      %p344 = scmp.lt.s32.totalorder %s27, 2
      // Predicated region
      $region37: #{sage_forward.1} parent=5 // pred_check
        %p345 = pneg %p344
      $region38: #{sage_forward.1} parent=5 // pred_check_branch
        %347 = sbr.rel (%p345) target = $region40
      $region39: #{sage_forward.1} parent=5 // pred_region
        // Predicated region
        $region41: #{sage_forward.1} parent=39 // pred_check
          %p348 = pneg %p47
        $region42: #{sage_forward.1} parent=39 // pred_check_branch
          %350 = sbr.rel (%p348) target = $region44
        $region43: #{sage_forward.1} parent=39 // pred_region
          %s351 = sand.u32 %s37, 1
          %s352 = scalar_lea.sflag [#allocation3], %s351
          %s353 = sand.u32 %s37, 1
          %s354 = smul.addr %s353, 128
          %s355 = scalar_lea.vmem [#allocation2], %s354
          %s356 = smul.u32 4, %s27
          %s358 = ssub.s32 2048, 2048
          %359 = vsyncadd %s352, %s358
          %s360 = smul.addr %s356, 8
          %s361 = smul.addr %s360, 64
          %s362 = scalar_lea.hbm %s0, %s361
          %s363 = sshll.u32 %s355, 4
          %s364 = int_to_ptr.vmem [resolvable:$true] %s363
          %369 = dma.hbm_to_vmem [thread:$0]  %s362, 2048, %s364, %s352, 64, 64, 4
        $region44: #{sage_forward.1} parent=39 // pred_fallthru
          _
        // Predicated region
        $region45: #{sage_forward.1} parent=39 // pred_check
          %p370 = pneg %p73
        $region46: #{sage_forward.1} parent=39 // pred_check_branch
          %372 = sbr.rel (%p370) target = $region48
        $region47: #{sage_forward.1} parent=39 // pred_region
          %s373 = sand.u32 %s27, 1
          %s374 = scalar_lea.sflag [#allocation6], %s373
          %s375 = sand.u32 %s63, 1
          %s376 = smul.addr %s375, 256
          %s377 = scalar_lea.vmem [#allocation5], %s376
          %s378 = smul.u32 4, %s27
          %s380 = ssub.s32 4096, 4096
          %381 = vsyncadd %s374, %s380
          %s382 = smul.addr %s378, 8
          %s383 = smul.addr %s382, 128
          %s384 = scalar_lea.hbm %s1, %s383
          %s385 = sshll.u32 %s377, 4
          %s386 = int_to_ptr.vmem [resolvable:$true] %s385
          %391 = dma.hbm_to_vmem [thread:$0]  %s384, 4096, %s386, %s374, 128, 128, 8
        $region48: #{sage_forward.1} parent=39 // pred_fallthru
          _
        // Predicated region
        $region49: #{sage_forward.1} parent=39 // pred_check
          %p392 = pneg %p99
        $region50: #{sage_forward.1} parent=39 // pred_check_branch
          %394 = sbr.rel (%p392) target = $region52
        $region51: #{sage_forward.1} parent=39 // pred_region
          %s395 = sand.u32 %s27, 1
          %s396 = scalar_lea.sflag [#allocation6], %s395
          %s397 = sand.u32 %s89, 1
          %s398 = smul.addr %s397, 128
          %s399 = scalar_lea.vmem [#allocation7], %s398
          %s400 = smul.u32 4, %s27
          %s402 = ssub.s32 2048, 2048
          %403 = vsyncadd %s396, %s402
          %s404 = smul.addr %s400, 8
          %s405 = smul.addr %s404, 64
          %s406 = scalar_lea.hbm %s2, %s405
          %s407 = sshll.u32 %s399, 4
          %s408 = int_to_ptr.vmem [resolvable:$true] %s407
          %413 = dma.hbm_to_vmem [thread:$0]  %s406, 2048, %s408, %s396, 64, 64, 4
        $region52: #{sage_forward.1} parent=39 // pred_fallthru
          _
      $region40: #{sage_forward.1} parent=5 // pred_fallthru
        _
      %p414 = scmp.le.s32.totalorder 1, %s27
      %p415 = scmp.lt.s32.totalorder %s27, 3
      %p416 = pnand %p414, %p415
      %p417 = pneg %p416
      // Predicated region
      $region53: #{sage_forward.1} parent=5 // pred_check
        _
      $region54: #{sage_forward.1} parent=5 // pred_check_branch
        %419 = sbr.rel (%p416) target = $region56
      $region55: #{sage_forward.1} parent=5 // pred_region
        %s420 = ssub.s32 %s27, 1
        %s421 = sand.u32 %s40, 1
        %s422 = scalar_lea.sflag [#allocation3], %s421
        %s423 = sand.u32 %s40, 1
        %s424 = smul.addr %s423, 128
        %s425 = scalar_lea.vmem [#allocation2], %s424
        // Predicated region
        $region57: #{sage_forward.1} parent=55 // pred_check
          %p426 = pneg %p53
        $region58: #{sage_forward.1} parent=55 // pred_check_branch
          %428 = sbr.rel (%p426) target = $region60
        $region59: #{sage_forward.1} parent=55 // pred_region
          %429 = dma.done %s422, 2048
        $region60: #{sage_forward.1} parent=55 // pred_fallthru
          _
        %s430 = sand.u32 %s32, 1
        %s431 = scalar_lea.sflag [#allocation6], %s430
        %s432 = sand.u32 %s66, 1
        %s433 = smul.addr %s432, 256
        %s434 = scalar_lea.vmem [#allocation5], %s433
        // Predicated region
        $region61: #{sage_forward.1} parent=55 // pred_check
          %p435 = pneg %p79
        $region62: #{sage_forward.1} parent=55 // pred_check_branch
          %437 = sbr.rel (%p435) target = $region64
        $region63: #{sage_forward.1} parent=55 // pred_region
          %438 = dma.done %s431, 4096
        $region64: #{sage_forward.1} parent=55 // pred_fallthru
          _
        %s439 = sand.u32 %s32, 1
        %s440 = scalar_lea.sflag [#allocation6], %s439
        %s441 = sand.u32 %s92, 1
        %s442 = smul.addr %s441, 128
        %s443 = scalar_lea.vmem [#allocation7], %s442
        // Predicated region
        $region65: #{sage_forward.1} parent=55 // pred_check
          %p444 = pneg %p105
        $region66: #{sage_forward.1} parent=55 // pred_check_branch
          %446 = sbr.rel (%p444) target = $region68
        $region67: #{sage_forward.1} parent=55 // pred_region
          %447 = dma.done %s440, 2048
        $region68: #{sage_forward.1} parent=55 // pred_fallthru
          _
        // Predicated region
        $region69: #{sage_forward.1} parent=55 // pred_check
          %p448 = pneg %p126
        $region70: #{sage_forward.1} parent=55 // pred_check_branch
          %450 = sbr.rel (%p448) target = $region72
        $region71: #{sage_forward.1} parent=55 // pred_region
          %451 = dma.done [#allocation9], 2048
        $region72: #{sage_forward.1} parent=55 // pred_fallthru
          _
        // Predicated region
        $region73: #{sage_forward.1} parent=55 // pred_check
          %p452 = pneg %p147
        $region74: #{sage_forward.1} parent=55 // pred_check_branch
          %454 = sbr.rel (%p452) target = $region76
        $region75: #{sage_forward.1} parent=55 // pred_region
          %455 = dma.done [#allocation9], 16
        $region76: #{sage_forward.1} parent=55 // pred_fallthru
          _
        // Predicated region
        $region77: #{sage_forward.1} parent=55 // pred_check
          %p456 = pneg %p168
        $region78: #{sage_forward.1} parent=55 // pred_check_branch
          %458 = sbr.rel (%p456) target = $region80
        $region79: #{sage_forward.1} parent=55 // pred_region
          %459 = dma.done [#allocation12], 2048
        $region80: #{sage_forward.1} parent=55 // pred_fallthru
          _
        // Predicated region
        $region81: #{sage_forward.1} parent=55 // pred_check
          %p460 = pneg %p189
        $region82: #{sage_forward.1} parent=55 // pred_check_branch
          %462 = sbr.rel (%p460) target = $region84
        $region83: #{sage_forward.1} parent=55 // pred_region
          %463 = dma.done [#allocation12], 16
        $region84: #{sage_forward.1} parent=55 // pred_fallthru
          _
        // Predicated region
        $region85: #{sage_forward.1} parent=55 // pred_check
          %p464 = pneg %p210
        $region86: #{sage_forward.1} parent=55 // pred_check_branch
          %466 = sbr.rel (%p464) target = $region88
        $region87: #{sage_forward.1} parent=55 // pred_region
          %467 = dma.done [#allocation15], 2048
        $region88: #{sage_forward.1} parent=55 // pred_fallthru
          _
        // Predicated region
        $region89: #{sage_forward.1} parent=55 // pred_check
          %p468 = pneg %p231
        $region90: #{sage_forward.1} parent=55 // pred_check_branch
          %470 = sbr.rel (%p468) target = $region92
        $region91: #{sage_forward.1} parent=55 // pred_region
          %471 = dma.done [#allocation15], 16
        $region92: #{sage_forward.1} parent=55 // pred_fallthru
          _
        %s472 = sand.u32 %s40, 1
        %s473 = scalar_lea.sflag [#allocation3], %s472
        %s474 = sand.u32 %s40, 1
        %s475 = smul.addr %s474, 128
        %s476 = scalar_lea.vmem [#allocation2], %s475
        %p477 = pneg %p53
        %p478 = pneg %p50
        %s479 = sand.u32 %s32, 1
        %s480 = scalar_lea.sflag [#allocation6], %s479
        %s481 = sand.u32 %s66, 1
        %s482 = smul.addr %s481, 256
        %s483 = scalar_lea.vmem [#allocation5], %s482
        %p484 = pneg %p79
        %p485 = pneg %p76
        %s486 = sand.u32 %s32, 1
        %s487 = scalar_lea.sflag [#allocation6], %s486
        %s488 = sand.u32 %s92, 1
        %s489 = smul.addr %s488, 128
        %s490 = scalar_lea.vmem [#allocation7], %s489
        %p491 = pneg %p105
        %p492 = pneg %p102
        %p493 = pneg %p126
        %p494 = pneg %p123
        %p495 = pneg %p147
        %p496 = pneg %p144
        %p497 = pneg %p168
        %p498 = pneg %p165
        %p499 = pneg %p189
        %p500 = pneg %p186
        %p501 = pneg %p210
        %p502 = pneg %p207
        %p503 = pneg %p231
        %p504 = pneg %p228
        %p505 = pneg %p257
        %p506 = pneg %p254
        %s507 = sand.u32 %s244, 1
        %s508 = scalar_lea.sflag [#allocation4], %s507
        %s509 = sand.u32 %s244, 1
        %s510 = smul.addr %s509, 256
        %s511 = scalar_lea.vmem [#allocation17], %s510
        %s512 = smul.u32 4, %s32
        %s513 = smul.u32 4, %s32
        %s514 = smul.u32 4, %s32
        %s515 = smul.u32 4, %s32
        %v517 = vld [vmem:[%s425] sm:$0xf]
        %v518 = vld [vmem:[%s425 + $0x4] sm:$0xf]
        %v519 = vld [vmem:[%s425 + $0x8] sm:$0xf]
        %v520 = vld [vmem:[%s425 + $0xc] sm:$0xf]
        %v521 = vld [vmem:[%s425 + $0x10] sm:$0xf]
        %v522 = vld [vmem:[%s425 + $0x14] sm:$0xf]
        %v523 = vld [vmem:[%s425 + $0x18] sm:$0xf]
        %v524 = vld [vmem:[%s425 + $0x1c] sm:$0xf]
        %v525 = vld [vmem:[%s425 + $0x20] sm:$0xf]
        %v526 = vld [vmem:[%s425 + $0x24] sm:$0xf]
        %v527 = vld [vmem:[%s425 + $0x28] sm:$0xf]
        %v528 = vld [vmem:[%s425 + $0x2c] sm:$0xf]
        %v529 = vld [vmem:[%s425 + $0x30] sm:$0xf]
        %v530 = vld [vmem:[%s425 + $0x34] sm:$0xf]
        %v531 = vld [vmem:[%s425 + $0x38] sm:$0xf]
        %v532 = vld [vmem:[%s425 + $0x3c] sm:$0xf]
        %v533 = vld [vmem:[%s425 + $0x40] sm:$0xf]
        %v534 = vld [vmem:[%s425 + $0x44] sm:$0xf]
        %v535 = vld [vmem:[%s425 + $0x48] sm:$0xf]
        %v536 = vld [vmem:[%s425 + $0x4c] sm:$0xf]
        %v537 = vld [vmem:[%s425 + $0x50] sm:$0xf]
        %v538 = vld [vmem:[%s425 + $0x54] sm:$0xf]
        %v539 = vld [vmem:[%s425 + $0x58] sm:$0xf]
        %v540 = vld [vmem:[%s425 + $0x5c] sm:$0xf]
        %v541 = vld [vmem:[%s425 + $0x60] sm:$0xf]
        %v542 = vld [vmem:[%s425 + $0x64] sm:$0xf]
        %v543 = vld [vmem:[%s425 + $0x68] sm:$0xf]
        %v544 = vld [vmem:[%s425 + $0x6c] sm:$0xf]
        %v545 = vld [vmem:[%s425 + $0x70] sm:$0xf]
        %v546 = vld [vmem:[%s425 + $0x74] sm:$0xf]
        %v547 = vld [vmem:[%s425 + $0x78] sm:$0xf]
        %v548 = vld [vmem:[%s425 + $0x7c] sm:$0xf]
        %v549 = vld [vmem:[%s434] sm:$0xff]
        %v550 = vld [vmem:[%s434 + $0x8] sm:$0xff]
        %v551 = vld [vmem:[%s434 + $0x10] sm:$0xff]
        %v552 = vld [vmem:[%s434 + $0x18] sm:$0xff]
        %v553 = vld [vmem:[%s434 + $0x20] sm:$0xff]
        %v554 = vld [vmem:[%s434 + $0x28] sm:$0xff]
        %v555 = vld [vmem:[%s434 + $0x30] sm:$0xff]
        %v556 = vld [vmem:[%s434 + $0x38] sm:$0xff]
        %v557 = vld [vmem:[%s434 + $0x40] sm:$0xff]
        %v558 = vld [vmem:[%s434 + $0x48] sm:$0xff]
        %v559 = vld [vmem:[%s434 + $0x50] sm:$0xff]
        %v560 = vld [vmem:[%s434 + $0x58] sm:$0xff]
        %v561 = vld [vmem:[%s434 + $0x60] sm:$0xff]
        %v562 = vld [vmem:[%s434 + $0x68] sm:$0xff]
        %v563 = vld [vmem:[%s434 + $0x70] sm:$0xff]
        %v564 = vld [vmem:[%s434 + $0x78] sm:$0xff]
        %v565 = vld [vmem:[%s434 + $0x80] sm:$0xff]
        %v566 = vld [vmem:[%s434 + $0x88] sm:$0xff]
        %v567 = vld [vmem:[%s434 + $0x90] sm:$0xff]
        %v568 = vld [vmem:[%s434 + $0x98] sm:$0xff]
        %v569 = vld [vmem:[%s434 + $0xa0] sm:$0xff]
        %v570 = vld [vmem:[%s434 + $0xa8] sm:$0xff]
        %v571 = vld [vmem:[%s434 + $0xb0] sm:$0xff]
        %v572 = vld [vmem:[%s434 + $0xb8] sm:$0xff]
        %v573 = vld [vmem:[%s434 + $0xc0] sm:$0xff]
        %v574 = vld [vmem:[%s434 + $0xc8] sm:$0xff]
        %v575 = vld [vmem:[%s434 + $0xd0] sm:$0xff]
        %v576 = vld [vmem:[%s434 + $0xd8] sm:$0xff]
        %v577 = vld [vmem:[%s434 + $0xe0] sm:$0xff]
        %v578 = vld [vmem:[%s434 + $0xe8] sm:$0xff]
        %v579 = vld [vmem:[%s434 + $0xf0] sm:$0xff]
        %v580 = vld [vmem:[%s434 + $0xf8] sm:$0xff]
        %v581 = vld [vmem:[%s443] sm:$0xf]
        %v582 = vld [vmem:[%s443 + $0x4] sm:$0xf]
        %v583 = vld [vmem:[%s443 + $0x8] sm:$0xf]
        %v584 = vld [vmem:[%s443 + $0xc] sm:$0xf]
        %v585 = vld [vmem:[%s443 + $0x10] sm:$0xf]
        %v586 = vld [vmem:[%s443 + $0x14] sm:$0xf]
        %v587 = vld [vmem:[%s443 + $0x18] sm:$0xf]
        %v588 = vld [vmem:[%s443 + $0x1c] sm:$0xf]
        %v589 = vld [vmem:[%s443 + $0x20] sm:$0xf]
        %v590 = vld [vmem:[%s443 + $0x24] sm:$0xf]
        %v591 = vld [vmem:[%s443 + $0x28] sm:$0xf]
        %v592 = vld [vmem:[%s443 + $0x2c] sm:$0xf]
        %v593 = vld [vmem:[%s443 + $0x30] sm:$0xf]
        %v594 = vld [vmem:[%s443 + $0x34] sm:$0xf]
        %v595 = vld [vmem:[%s443 + $0x38] sm:$0xf]
        %v596 = vld [vmem:[%s443 + $0x3c] sm:$0xf]
        %v597 = vld [vmem:[%s443 + $0x40] sm:$0xf]
        %v598 = vld [vmem:[%s443 + $0x44] sm:$0xf]
        %v599 = vld [vmem:[%s443 + $0x48] sm:$0xf]
        %v600 = vld [vmem:[%s443 + $0x4c] sm:$0xf]
        %v601 = vld [vmem:[%s443 + $0x50] sm:$0xf]
        %v602 = vld [vmem:[%s443 + $0x54] sm:$0xf]
        %v603 = vld [vmem:[%s443 + $0x58] sm:$0xf]
        %v604 = vld [vmem:[%s443 + $0x5c] sm:$0xf]
        %v605 = vld [vmem:[%s443 + $0x60] sm:$0xf]
        %v606 = vld [vmem:[%s443 + $0x64] sm:$0xf]
        %v607 = vld [vmem:[%s443 + $0x68] sm:$0xf]
        %v608 = vld [vmem:[%s443 + $0x6c] sm:$0xf]
        %v609 = vld [vmem:[%s443 + $0x70] sm:$0xf]
        %v610 = vld [vmem:[%s443 + $0x74] sm:$0xf]
        %v611 = vld [vmem:[%s443 + $0x78] sm:$0xf]
        %v612 = vld [vmem:[%s443 + $0x7c] sm:$0xf]
        %v621 = vunpack.c.l.b16 %v517
        %v622 = vunpack.c.l.b16 %v518
        %v623 = vunpack.c.l.b16 %v519
        %v624 = vunpack.c.l.b16 %v520
        %v625 = vunpack.c.l.b16 %v521
        %v626 = vunpack.c.l.b16 %v522
        %v627 = vunpack.c.l.b16 %v523
        %v628 = vunpack.c.l.b16 %v524
        %v629 = vpack.c.b16 %v622, %v621
        %v630 = vpack.c.b16 %v624, %v623
        %v631 = vpack.c.b16 %v626, %v625
        %v632 = vpack.c.b16 %v628, %v627
        %v641 = vunpack.c.l.b16 %v581
        %v642 = vunpack.c.l.b16 %v582
        %v643 = vunpack.c.l.b16 %v583
        %v644 = vunpack.c.l.b16 %v584
        %v645 = vunpack.c.l.b16 %v585
        %v646 = vunpack.c.l.b16 %v586
        %v647 = vunpack.c.l.b16 %v587
        %v648 = vunpack.c.l.b16 %v588
        %v649 = vpack.c.b16 %v642, %v641
        %v650 = vpack.c.b16 %v644, %v643
        %v651 = vpack.c.b16 %v646, %v645
        %v652 = vpack.c.b16 %v648, %v647
        %vm657 = vcmask 523264
        %v659 = vsel %vm657, %v629, 0
        %v662 = vsel %vm657, %v630, 0
        %v665 = vsel %vm657, %v631, 0
        %v668 = vsel %vm657, %v632, 0
        %670 = vmatprep.subr.bf16.mxu0 0
        %671 = vmatpush1.bf16.msra.mxu0 %v649
        %672 = vmatprep.subr.bf16.mxu0 0
        %673 = vmatpush1.bf16.msra.mxu0 %v650
        %674 = vmatprep.subr.bf16.mxu0 0
        %675 = vmatpush1.bf16.msra.mxu0 %v651
        %676 = vmatprep.subr.bf16.mxu0 0
        %677 = vmatpush1.bf16.msra.mxu0 %v652
        %678 = vmatprep.subr.bf16.mxu0 0
        %679 = vmatpush1.bf16.msra.mxu0 0
        %680 = vmatprep.subr.bf16.mxu0 0
        %681 = vmatpush1.bf16.msra.mxu0 0
        %682 = vmatprep.subr.bf16.mxu0 0
        %683 = vmatpush1.bf16.msra.mxu0 0
        %684 = vmatprep.subr.bf16.mxu0 0
        %685 = vmatpush1.bf16.msra.mxu0 0
        %686 = vmatprep.subr.bf16.mxu0 0
        %687 = vmatpush1.bf16.msra.mxu0 0
        %688 = vmatprep.subr.bf16.mxu0 0
        %689 = vmatpush1.bf16.msra.mxu0 0
        %690 = vmatprep.subr.bf16.mxu0 0
        %691 = vmatpush1.bf16.msra.mxu0 0
        %692 = vmatprep.subr.bf16.mxu0 0
        %693 = vmatpush1.bf16.msra.mxu0 0
        %694 = vmatprep.subr.bf16.mxu0 0
        %695 = vmatpush1.bf16.msra.mxu0 0
        %696 = vmatprep.subr.bf16.mxu0 0
        %697 = vmatpush1.bf16.msra.mxu0 0
        %698 = vmatprep.subr.bf16.mxu0 0
        %699 = vmatpush1.bf16.msra.mxu0 0
        %700 = vmatprep.subr.bf16.mxu0 0
        %701 = vmatpush1.bf16.msra.mxu0 0
        %702 = vmatprep.mubr.bf16.mxu0 0
        %703 = vmatmul.mubr.bf16.gmra.mrb[0].mxu0 %v659
        %v704 = vpop.f32.mrb[0].mxu0
        %v705 = vadd.f32 0.0, %v704
        %v706 = vpop.f32.mrb[0].mxu0
        %v707 = vpop.f32.mrb[0].mxu0
        %v708 = vadd.f32 0.0, %v707
        %v709 = vpop.f32.mrb[0].mxu0
        %710 = vmatprep.mubr.bf16.mxu0 0
        %711 = vmatmul.mubr.bf16.gmra.mrb[0].mxu0 %v662
        %v712 = vpop.f32.mrb[0].mxu0
        %v713 = vadd.f32 0.0, %v712
        %v714 = vpop.f32.mrb[0].mxu0
        %v715 = vpop.f32.mrb[0].mxu0
        %v716 = vadd.f32 0.0, %v715
        %v717 = vpop.f32.mrb[0].mxu0
        %718 = vmatprep.mubr.bf16.mxu0 0
        %719 = vmatmul.mubr.bf16.gmra.mrb[0].mxu0 %v665
        %v720 = vpop.f32.mrb[0].mxu0
        %v721 = vadd.f32 0.0, %v720
        %v722 = vpop.f32.mrb[0].mxu0
        %v723 = vpop.f32.mrb[0].mxu0
        %v724 = vadd.f32 0.0, %v723
        %v725 = vpop.f32.mrb[0].mxu0
        %726 = vmatprep.mubr.bf16.mxu0 0
        %727 = vmatmul.mubr.bf16.gmra.mrb[0].mxu0 %v668
        %v728 = vpop.f32.mrb[0].mxu0
        %v729 = vadd.f32 0.0, %v728
        %v730 = vpop.f32.mrb[0].mxu0
        %v731 = vpop.f32.mrb[0].mxu0
        %v732 = vadd.f32 0.0, %v731
        %v733 = vpop.f32.mrb[0].mxu0
        %734 = vdwg.mxu0
        %v743 = vunpack.c.l.b16 %v525
        %v744 = vunpack.c.l.b16 %v526
        %v745 = vunpack.c.l.b16 %v527
        %v746 = vunpack.c.l.b16 %v528
        %v747 = vunpack.c.l.b16 %v529
        %v748 = vunpack.c.l.b16 %v530
        %v749 = vunpack.c.l.b16 %v531
        %v750 = vunpack.c.l.b16 %v532
        %v751 = vpack.c.b16 %v744, %v743
        %v752 = vpack.c.b16 %v746, %v745
        %v753 = vpack.c.b16 %v748, %v747
        %v754 = vpack.c.b16 %v750, %v749
        %v763 = vunpack.c.l.b16 %v589
        %v764 = vunpack.c.l.b16 %v590
        %v765 = vunpack.c.l.b16 %v591
        %v766 = vunpack.c.l.b16 %v592
        %v767 = vunpack.c.l.b16 %v593
        %v768 = vunpack.c.l.b16 %v594
        %v769 = vunpack.c.l.b16 %v595
        %v770 = vunpack.c.l.b16 %v596
        %v771 = vpack.c.b16 %v764, %v763
        %v772 = vpack.c.b16 %v766, %v765
        %v773 = vpack.c.b16 %v768, %v767
        %v774 = vpack.c.b16 %v770, %v769
        %v780 = vsel %vm657, %v751, 0
        %v783 = vsel %vm657, %v752, 0
        %v786 = vsel %vm657, %v753, 0
        %v789 = vsel %vm657, %v754, 0
        %791 = vmatprep.subr.bf16.mxu0 0
        %792 = vmatpush1.bf16.msra.mxu0 %v771
        %793 = vmatprep.subr.bf16.mxu0 0
        %794 = vmatpush1.bf16.msra.mxu0 %v772
        %795 = vmatprep.subr.bf16.mxu0 0
        %796 = vmatpush1.bf16.msra.mxu0 %v773
        %797 = vmatprep.subr.bf16.mxu0 0
        %798 = vmatpush1.bf16.msra.mxu0 %v774
        %799 = vmatprep.subr.bf16.mxu0 0
        %800 = vmatpush1.bf16.msra.mxu0 0
        %801 = vmatprep.subr.bf16.mxu0 0
        %802 = vmatpush1.bf16.msra.mxu0 0
        %803 = vmatprep.subr.bf16.mxu0 0
        %804 = vmatpush1.bf16.msra.mxu0 0
        %805 = vmatprep.subr.bf16.mxu0 0
        %806 = vmatpush1.bf16.msra.mxu0 0
        %807 = vmatprep.subr.bf16.mxu0 0
        %808 = vmatpush1.bf16.msra.mxu0 0
        %809 = vmatprep.subr.bf16.mxu0 0
        %810 = vmatpush1.bf16.msra.mxu0 0
        %811 = vmatprep.subr.bf16.mxu0 0
        %812 = vmatpush1.bf16.msra.mxu0 0
        %813 = vmatprep.subr.bf16.mxu0 0
        %814 = vmatpush1.bf16.msra.mxu0 0
        %815 = vmatprep.subr.bf16.mxu0 0
        %816 = vmatpush1.bf16.msra.mxu0 0
        %817 = vmatprep.subr.bf16.mxu0 0
        %818 = vmatpush1.bf16.msra.mxu0 0
        %819 = vmatprep.subr.bf16.mxu0 0
        %820 = vmatpush1.bf16.msra.mxu0 0
        %821 = vmatprep.subr.bf16.mxu0 0
        %822 = vmatpush1.bf16.msra.mxu0 0
        %823 = vmatprep.mubr.bf16.mxu0 0
        %824 = vmatmul.mubr.bf16.gmra.mrb[0].mxu0 %v780
        %v825 = vpop.f32.mrb[0].mxu0
        %v826 = vadd.f32 0.0, %v825
        %v827 = vpop.f32.mrb[0].mxu0
        %v828 = vpop.f32.mrb[0].mxu0
        %v829 = vadd.f32 0.0, %v828
        %v830 = vpop.f32.mrb[0].mxu0
        %831 = vmatprep.mubr.bf16.mxu0 0
        %832 = vmatmul.mubr.bf16.gmra.mrb[0].mxu0 %v783
        %v833 = vpop.f32.mrb[0].mxu0
        %v834 = vadd.f32 0.0, %v833
        %v835 = vpop.f32.mrb[0].mxu0
        %v836 = vpop.f32.mrb[0].mxu0
        %v837 = vadd.f32 0.0, %v836
        %v838 = vpop.f32.mrb[0].mxu0
        %839 = vmatprep.mubr.bf16.mxu0 0
        %840 = vmatmul.mubr.bf16.gmra.mrb[0].mxu0 %v786
        %v841 = vpop.f32.mrb[0].mxu0
        %v842 = vadd.f32 0.0, %v841
        %v843 = vpop.f32.mrb[0].mxu0
        %v844 = vpop.f32.mrb[0].mxu0
        %v845 = vadd.f32 0.0, %v844
        %v846 = vpop.f32.mrb[0].mxu0
        %847 = vmatprep.mubr.bf16.mxu0 0
        %848 = vmatmul.mubr.bf16.gmra.mrb[0].mxu0 %v789
        %v849 = vpop.f32.mrb[0].mxu0
        %v850 = vadd.f32 0.0, %v849
        %v851 = vpop.f32.mrb[0].mxu0
        %v852 = vpop.f32.mrb[0].mxu0
        %v853 = vadd.f32 0.0, %v852
        %v854 = vpop.f32.mrb[0].mxu0
        %855 = vdwg.mxu0
        %v864 = vunpack.c.l.b16 %v533
        %v865 = vunpack.c.l.b16 %v534
        %v866 = vunpack.c.l.b16 %v535
        %v867 = vunpack.c.l.b16 %v536
        %v868 = vunpack.c.l.b16 %v537
        %v869 = vunpack.c.l.b16 %v538
        %v870 = vunpack.c.l.b16 %v539
        %v871 = vunpack.c.l.b16 %v540
        %v872 = vpack.c.b16 %v865, %v864
        %v873 = vpack.c.b16 %v867, %v866
        %v874 = vpack.c.b16 %v869, %v868
        %v875 = vpack.c.b16 %v871, %v870
        %v884 = vunpack.c.l.b16 %v597
        %v885 = vunpack.c.l.b16 %v598
        %v886 = vunpack.c.l.b16 %v599
        %v887 = vunpack.c.l.b16 %v600
        %v888 = vunpack.c.l.b16 %v601
        %v889 = vunpack.c.l.b16 %v602
        %v890 = vunpack.c.l.b16 %v603
        %v891 = vunpack.c.l.b16 %v604
        %v892 = vpack.c.b16 %v885, %v884
        %v893 = vpack.c.b16 %v887, %v886
        %v894 = vpack.c.b16 %v889, %v888
        %v895 = vpack.c.b16 %v891, %v890
        %v901 = vsel %vm657, %v872, 0
        %v904 = vsel %vm657, %v873, 0
        %v907 = vsel %vm657, %v874, 0
        %v910 = vsel %vm657, %v875, 0
        %912 = vmatprep.subr.bf16.mxu0 0
        %913 = vmatpush1.bf16.msra.mxu0 %v892
        %914 = vmatprep.subr.bf16.mxu0 0
        %915 = vmatpush1.bf16.msra.mxu0 %v893
        %916 = vmatprep.subr.bf16.mxu0 0
        %917 = vmatpush1.bf16.msra.mxu0 %v894
        %918 = vmatprep.subr.bf16.mxu0 0
        %919 = vmatpush1.bf16.msra.mxu0 %v895
        %920 = vmatprep.subr.bf16.mxu0 0
        %921 = vmatpush1.bf16.msra.mxu0 0
        %922 = vmatprep.subr.bf16.mxu0 0
        %923 = vmatpush1.bf16.msra.mxu0 0
        %924 = vmatprep.subr.bf16.mxu0 0
        %925 = vmatpush1.bf16.msra.mxu0 0
        %926 = vmatprep.subr.bf16.mxu0 0
        %927 = vmatpush1.bf16.msra.mxu0 0
        %928 = vmatprep.subr.bf16.mxu0 0
        %929 = vmatpush1.bf16.msra.mxu0 0
        %930 = vmatprep.subr.bf16.mxu0 0
        %931 = vmatpush1.bf16.msra.mxu0 0
        %932 = vmatprep.subr.bf16.mxu0 0
        %933 = vmatpush1.bf16.msra.mxu0 0
        %934 = vmatprep.subr.bf16.mxu0 0
        %935 = vmatpush1.bf16.msra.mxu0 0
        %936 = vmatprep.subr.bf16.mxu0 0
        %937 = vmatpush1.bf16.msra.mxu0 0
        %938 = vmatprep.subr.bf16.mxu0 0
        %939 = vmatpush1.bf16.msra.mxu0 0
        %940 = vmatprep.subr.bf16.mxu0 0
        %941 = vmatpush1.bf16.msra.mxu0 0
        %942 = vmatprep.subr.bf16.mxu0 0
        %943 = vmatpush1.bf16.msra.mxu0 0
        %944 = vmatprep.mubr.bf16.mxu0 0
        %945 = vmatmul.mubr.bf16.gmra.mrb[0].mxu0 %v901
        %v946 = vpop.f32.mrb[0].mxu0
        %v947 = vadd.f32 0.0, %v946
        %v948 = vpop.f32.mrb[0].mxu0
        %v949 = vpop.f32.mrb[0].mxu0
        %v950 = vadd.f32 0.0, %v949
        %v951 = vpop.f32.mrb[0].mxu0
        %952 = vmatprep.mubr.bf16.mxu0 0
        %953 = vmatmul.mubr.bf16.gmra.mrb[0].mxu0 %v904
        %v954 = vpop.f32.mrb[0].mxu0
        %v955 = vadd.f32 0.0, %v954
        %v956 = vpop.f32.mrb[0].mxu0
        %v957 = vpop.f32.mrb[0].mxu0
        %v958 = vadd.f32 0.0, %v957
        %v959 = vpop.f32.mrb[0].mxu0
        %960 = vmatprep.mubr.bf16.mxu0 0
        %961 = vmatmul.mubr.bf16.gmra.mrb[0].mxu0 %v907
        %v962 = vpop.f32.mrb[0].mxu0
        %v963 = vadd.f32 0.0, %v962
        %v964 = vpop.f32.mrb[0].mxu0
        %v965 = vpop.f32.mrb[0].mxu0
        %v966 = vadd.f32 0.0, %v965
        %v967 = vpop.f32.mrb[0].mxu0
        %968 = vmatprep.mubr.bf16.mxu0 0
        %969 = vmatmul.mubr.bf16.gmra.mrb[0].mxu0 %v910
        %v970 = vpop.f32.mrb[0].mxu0
        %v971 = vadd.f32 0.0, %v970
        %v972 = vpop.f32.mrb[0].mxu0
        %v973 = vpop.f32.mrb[0].mxu0
        %v974 = vadd.f32 0.0, %v973
        %v975 = vpop.f32.mrb[0].mxu0
        %976 = vdwg.mxu0
        %v985 = vunpack.c.l.b16 %v541
        %v986 = vunpack.c.l.b16 %v542
        %v987 = vunpack.c.l.b16 %v543
        %v988 = vunpack.c.l.b16 %v544
        %v989 = vunpack.c.l.b16 %v545
        %v990 = vunpack.c.l.b16 %v546
        %v991 = vunpack.c.l.b16 %v547
        %v992 = vunpack.c.l.b16 %v548
        %v993 = vpack.c.b16 %v986, %v985
        %v994 = vpack.c.b16 %v988, %v987
        %v995 = vpack.c.b16 %v990, %v989
        %v996 = vpack.c.b16 %v992, %v991
        %v1005 = vunpack.c.l.b16 %v605
        %v1006 = vunpack.c.l.b16 %v606
        %v1007 = vunpack.c.l.b16 %v607
        %v1008 = vunpack.c.l.b16 %v608
        %v1009 = vunpack.c.l.b16 %v609
        %v1010 = vunpack.c.l.b16 %v610
        %v1011 = vunpack.c.l.b16 %v611
        %v1012 = vunpack.c.l.b16 %v612
        %v1013 = vpack.c.b16 %v1006, %v1005
        %v1014 = vpack.c.b16 %v1008, %v1007
        %v1015 = vpack.c.b16 %v1010, %v1009
        %v1016 = vpack.c.b16 %v1012, %v1011
        %v1022 = vsel %vm657, %v993, 0
        %v1025 = vsel %vm657, %v994, 0
        %v1028 = vsel %vm657, %v995, 0
        %v1031 = vsel %vm657, %v996, 0
        %1033 = vmatprep.subr.bf16.mxu0 0
        %1034 = vmatpush1.bf16.msra.mxu0 %v1013
        %1035 = vmatprep.subr.bf16.mxu0 0
        %1036 = vmatpush1.bf16.msra.mxu0 %v1014
        %1037 = vmatprep.subr.bf16.mxu0 0
        %1038 = vmatpush1.bf16.msra.mxu0 %v1015
        %1039 = vmatprep.subr.bf16.mxu0 0
        %1040 = vmatpush1.bf16.msra.mxu0 %v1016
        %1041 = vmatprep.subr.bf16.mxu0 0
        %1042 = vmatpush1.bf16.msra.mxu0 0
        %1043 = vmatprep.subr.bf16.mxu0 0
        %1044 = vmatpush1.bf16.msra.mxu0 0
        %1045 = vmatprep.subr.bf16.mxu0 0
        %1046 = vmatpush1.bf16.msra.mxu0 0
        %1047 = vmatprep.subr.bf16.mxu0 0
        %1048 = vmatpush1.bf16.msra.mxu0 0
        %1049 = vmatprep.subr.bf16.mxu0 0
        %1050 = vmatpush1.bf16.msra.mxu0 0
        %1051 = vmatprep.subr.bf16.mxu0 0
        %1052 = vmatpush1.bf16.msra.mxu0 0
        %1053 = vmatprep.subr.bf16.mxu0 0
        %1054 = vmatpush1.bf16.msra.mxu0 0
        %1055 = vmatprep.subr.bf16.mxu0 0
        %1056 = vmatpush1.bf16.msra.mxu0 0
        %1057 = vmatprep.subr.bf16.mxu0 0
        %1058 = vmatpush1.bf16.msra.mxu0 0
        %1059 = vmatprep.subr.bf16.mxu0 0
        %1060 = vmatpush1.bf16.msra.mxu0 0
        %1061 = vmatprep.subr.bf16.mxu0 0
        %1062 = vmatpush1.bf16.msra.mxu0 0
        %1063 = vmatprep.subr.bf16.mxu0 0
        %1064 = vmatpush1.bf16.msra.mxu0 0
        %1065 = vmatprep.mubr.bf16.mxu0 0
        %1066 = vmatmul.mubr.bf16.gmra.mrb[0].mxu0 %v1022
        %v1067 = vpop.f32.mrb[0].mxu0
        %v1068 = vadd.f32 0.0, %v1067
        %v1069 = vpop.f32.mrb[0].mxu0
        %v1070 = vpop.f32.mrb[0].mxu0
        %v1071 = vadd.f32 0.0, %v1070
        %v1072 = vpop.f32.mrb[0].mxu0
        %1073 = vmatprep.mubr.bf16.mxu0 0
        %1074 = vmatmul.mubr.bf16.gmra.mrb[0].mxu0 %v1025
        %v1075 = vpop.f32.mrb[0].mxu0
        %v1076 = vadd.f32 0.0, %v1075
        %v1077 = vpop.f32.mrb[0].mxu0
        %v1078 = vpop.f32.mrb[0].mxu0
        %v1079 = vadd.f32 0.0, %v1078
        %v1080 = vpop.f32.mrb[0].mxu0
        %1081 = vmatprep.mubr.bf16.mxu0 0
        %1082 = vmatmul.mubr.bf16.gmra.mrb[0].mxu0 %v1028
        %v1083 = vpop.f32.mrb[0].mxu0
        %v1084 = vadd.f32 0.0, %v1083
        %v1085 = vpop.f32.mrb[0].mxu0
        %v1086 = vpop.f32.mrb[0].mxu0
        %v1087 = vadd.f32 0.0, %v1086
        %v1088 = vpop.f32.mrb[0].mxu0
        %1089 = vmatprep.mubr.bf16.mxu0 0
        %1090 = vmatmul.mubr.bf16.gmra.mrb[0].mxu0 %v1031
        %v1091 = vpop.f32.mrb[0].mxu0
        %v1092 = vadd.f32 0.0, %v1091
        %v1093 = vpop.f32.mrb[0].mxu0
        %v1094 = vpop.f32.mrb[0].mxu0
        %v1095 = vadd.f32 0.0, %v1094
        %v1096 = vpop.f32.mrb[0].mxu0
        %1097 = vdwg.mxu0
        %1099 = vset.pattern.permute.xlu0 0
        %1100 = vperm.xlu0 %1099, %v549
        %v1101 = vpop.permute.xlu0 %1100
        %1104 = vset.pattern.permute.xlu0 0
        %1105 = vperm.xlu0 %1104, %v550
        %v1106 = vpop.permute.xlu0 %1105
        %1109 = vset.pattern.permute.xlu0 0
        %1110 = vperm.xlu0 %1109, %v551
        %v1111 = vpop.permute.xlu0 %1110
        %1114 = vset.pattern.permute.xlu0 0
        %1115 = vperm.xlu0 %1114, %v552
        %v1116 = vpop.permute.xlu0 %1115
        %1119 = vset.pattern.permute.xlu0 0
        %1120 = vperm.xlu0 %1119, %v553
        %v1121 = vpop.permute.xlu0 %1120
        %1124 = vset.pattern.permute.xlu0 0
        %1125 = vperm.xlu0 %1124, %v554
        %v1126 = vpop.permute.xlu0 %1125
        %1129 = vset.pattern.permute.xlu0 0
        %1130 = vperm.xlu0 %1129, %v555
        %v1131 = vpop.permute.xlu0 %1130
        %1134 = vset.pattern.permute.xlu0 0
        %1135 = vperm.xlu0 %1134, %v556
        %v1136 = vpop.permute.xlu0 %1135
        %1139 = vset.pattern.permute.xlu0 0
        %1140 = vperm.xlu0 %1139, %v557
        %v1141 = vpop.permute.xlu0 %1140
        %1144 = vset.pattern.permute.xlu0 0
        %1145 = vperm.xlu0 %1144, %v558
        %v1146 = vpop.permute.xlu0 %1145
        %1149 = vset.pattern.permute.xlu0 0
        %1150 = vperm.xlu0 %1149, %v559
        %v1151 = vpop.permute.xlu0 %1150
        %1154 = vset.pattern.permute.xlu0 0
        %1155 = vperm.xlu0 %1154, %v560
        %v1156 = vpop.permute.xlu0 %1155
        %1159 = vset.pattern.permute.xlu0 0
        %1160 = vperm.xlu0 %1159, %v561
        %v1161 = vpop.permute.xlu0 %1160
        %1164 = vset.pattern.permute.xlu0 0
        %1165 = vperm.xlu0 %1164, %v562
        %v1166 = vpop.permute.xlu0 %1165
        %1169 = vset.pattern.permute.xlu0 0
        %1170 = vperm.xlu0 %1169, %v563
        %v1171 = vpop.permute.xlu0 %1170
        %1174 = vset.pattern.permute.xlu0 0
        %1175 = vperm.xlu0 %1174, %v564
        %v1176 = vpop.permute.xlu0 %1175
        %1179 = vset.pattern.permute.xlu0 0
        %1180 = vperm.xlu0 %1179, %v565
        %v1181 = vpop.permute.xlu0 %1180
        %1184 = vset.pattern.permute.xlu0 0
        %1185 = vperm.xlu0 %1184, %v566
        %v1186 = vpop.permute.xlu0 %1185
        %1189 = vset.pattern.permute.xlu0 0
        %1190 = vperm.xlu0 %1189, %v567
        %v1191 = vpop.permute.xlu0 %1190
        %1194 = vset.pattern.permute.xlu0 0
        %1195 = vperm.xlu0 %1194, %v568
        %v1196 = vpop.permute.xlu0 %1195
        %1199 = vset.pattern.permute.xlu0 0
        %1200 = vperm.xlu0 %1199, %v569
        %v1201 = vpop.permute.xlu0 %1200
        %1204 = vset.pattern.permute.xlu0 0
        %1205 = vperm.xlu0 %1204, %v570
        %v1206 = vpop.permute.xlu0 %1205
        %1209 = vset.pattern.permute.xlu0 0
        %1210 = vperm.xlu0 %1209, %v571
        %v1211 = vpop.permute.xlu0 %1210
        %1214 = vset.pattern.permute.xlu0 0
        %1215 = vperm.xlu0 %1214, %v572
        %v1216 = vpop.permute.xlu0 %1215
        %1219 = vset.pattern.permute.xlu0 0
        %1220 = vperm.xlu0 %1219, %v573
        %v1221 = vpop.permute.xlu0 %1220
        %1224 = vset.pattern.permute.xlu0 0
        %1225 = vperm.xlu0 %1224, %v574
        %v1226 = vpop.permute.xlu0 %1225
        %1229 = vset.pattern.permute.xlu0 0
        %1230 = vperm.xlu0 %1229, %v575
        %v1231 = vpop.permute.xlu0 %1230
        %1234 = vset.pattern.permute.xlu0 0
        %1235 = vperm.xlu0 %1234, %v576
        %v1236 = vpop.permute.xlu0 %1235
        %1239 = vset.pattern.permute.xlu0 0
        %1240 = vperm.xlu0 %1239, %v577
        %v1241 = vpop.permute.xlu0 %1240
        %1244 = vset.pattern.permute.xlu0 0
        %1245 = vperm.xlu0 %1244, %v578
        %v1246 = vpop.permute.xlu0 %1245
        %1249 = vset.pattern.permute.xlu0 0
        %1250 = vperm.xlu0 %1249, %v579
        %v1251 = vpop.permute.xlu0 %1250
        %1254 = vset.pattern.permute.xlu0 0
        %1255 = vperm.xlu0 %1254, %v580
        %v1256 = vpop.permute.xlu0 %1255
        %v1258 = vmul.f32 %v705, %v1101
        %v1259 = vmul.f32 %v708, %v1106
        %v1260 = vmul.f32 %v713, %v1111
        %v1261 = vmul.f32 %v716, %v1116
        %v1262 = vmul.f32 %v721, %v1121
        %v1263 = vmul.f32 %v724, %v1126
        %v1264 = vmul.f32 %v729, %v1131
        %v1265 = vmul.f32 %v732, %v1136
        %v1266 = vmul.f32 %v826, %v1141
        %v1267 = vmul.f32 %v829, %v1146
        %v1268 = vmul.f32 %v834, %v1151
        %v1269 = vmul.f32 %v837, %v1156
        %v1270 = vmul.f32 %v842, %v1161
        %v1271 = vmul.f32 %v845, %v1166
        %v1272 = vmul.f32 %v850, %v1171
        %v1273 = vmul.f32 %v853, %v1176
        %v1274 = vmul.f32 %v947, %v1181
        %v1275 = vmul.f32 %v950, %v1186
        %v1276 = vmul.f32 %v955, %v1191
        %v1277 = vmul.f32 %v958, %v1196
        %v1278 = vmul.f32 %v963, %v1201
        %v1279 = vmul.f32 %v966, %v1206
        %v1280 = vmul.f32 %v971, %v1211
        %v1281 = vmul.f32 %v974, %v1216
        %v1282 = vmul.f32 %v1068, %v1221
        %v1283 = vmul.f32 %v1071, %v1226
        %v1284 = vmul.f32 %v1076, %v1231
        %v1285 = vmul.f32 %v1079, %v1236
        %v1286 = vmul.f32 %v1084, %v1241
        %v1287 = vmul.f32 %v1087, %v1246
        %v1288 = vmul.f32 %v1092, %v1251
        %v1289 = vmul.f32 %v1095, %v1256
        %v1290 = vpack.c.bf16 %v1259, %v1258
        %v1291 = vpack.c.bf16 %v1261, %v1260
        %v1292 = vpack.c.bf16 %v1263, %v1262
        %v1293 = vpack.c.bf16 %v1265, %v1264
        %v1294 = vpack.c.bf16 %v1267, %v1266
        %v1295 = vpack.c.bf16 %v1269, %v1268
        %v1296 = vpack.c.bf16 %v1271, %v1270
        %v1297 = vpack.c.bf16 %v1273, %v1272
        %v1298 = vpack.c.bf16 %v1275, %v1274
        %v1299 = vpack.c.bf16 %v1277, %v1276
        %v1300 = vpack.c.bf16 %v1279, %v1278
        %v1301 = vpack.c.bf16 %v1281, %v1280
        %v1302 = vpack.c.bf16 %v1283, %v1282
        %v1303 = vpack.c.bf16 %v1285, %v1284
        %v1304 = vpack.c.bf16 %v1287, %v1286
        %v1305 = vpack.c.bf16 %v1289, %v1288
        %v1306 = vld [vmem:[#allocation8] sm:$0xf]
        %v1307 = vld [vmem:[#allocation8 + $0x4] sm:$0xf]
        %v1308 = vld [vmem:[#allocation8 + $0x8] sm:$0xf]
        %v1309 = vld [vmem:[#allocation8 + $0xc] sm:$0xf]
        %v1310 = vld [vmem:[#allocation8 + $0x10] sm:$0xf]
        %v1311 = vld [vmem:[#allocation8 + $0x14] sm:$0xf]
        %v1312 = vld [vmem:[#allocation8 + $0x18] sm:$0xf]
        %v1313 = vld [vmem:[#allocation8 + $0x1c] sm:$0xf]
        %v1314 = vld [vmem:[#allocation8 + $0x20] sm:$0xf]
        %v1315 = vld [vmem:[#allocation8 + $0x24] sm:$0xf]
        %v1316 = vld [vmem:[#allocation8 + $0x28] sm:$0xf]
        %v1317 = vld [vmem:[#allocation8 + $0x2c] sm:$0xf]
        %v1318 = vld [vmem:[#allocation8 + $0x30] sm:$0xf]
        %v1319 = vld [vmem:[#allocation8 + $0x34] sm:$0xf]
        %v1320 = vld [vmem:[#allocation8 + $0x38] sm:$0xf]
        %v1321 = vld [vmem:[#allocation8 + $0x3c] sm:$0xf]
        %v1322 = vld [vmem:[#allocation8 + $0x40] sm:$0xf]
        %v1323 = vld [vmem:[#allocation8 + $0x44] sm:$0xf]
        %v1324 = vld [vmem:[#allocation8 + $0x48] sm:$0xf]
        %v1325 = vld [vmem:[#allocation8 + $0x4c] sm:$0xf]
        %v1326 = vld [vmem:[#allocation8 + $0x50] sm:$0xf]
        %v1327 = vld [vmem:[#allocation8 + $0x54] sm:$0xf]
        %v1328 = vld [vmem:[#allocation8 + $0x58] sm:$0xf]
        %v1329 = vld [vmem:[#allocation8 + $0x5c] sm:$0xf]
        %v1330 = vld [vmem:[#allocation8 + $0x60] sm:$0xf]
        %v1331 = vld [vmem:[#allocation8 + $0x64] sm:$0xf]
        %v1332 = vld [vmem:[#allocation8 + $0x68] sm:$0xf]
        %v1333 = vld [vmem:[#allocation8 + $0x6c] sm:$0xf]
        %v1334 = vld [vmem:[#allocation8 + $0x70] sm:$0xf]
        %v1335 = vld [vmem:[#allocation8 + $0x74] sm:$0xf]
        %v1336 = vld [vmem:[#allocation8 + $0x78] sm:$0xf]
        %v1337 = vld [vmem:[#allocation8 + $0x7c] sm:$0xf]
        %v1338 = vld [vmem:[#allocation10] sm:$0x1]
        %v1340 = vlaneseq
        %v1341 = vshrl.u32 %v1340, 7
        %v1342 = vsub.s32 0, %v1341
        %v1343 = vrot.slane %v1338, %v1342
        %v1377 = vunpack.c.l.b16 %v1306
        %v1378 = vunpack.c.l.b16 %v1307
        %v1379 = vunpack.c.l.b16 %v1308
        %v1380 = vunpack.c.l.b16 %v1309
        %v1381 = vunpack.c.l.b16 %v1310
        %v1382 = vunpack.c.l.b16 %v1311
        %v1383 = vunpack.c.l.b16 %v1312
        %v1384 = vunpack.c.l.b16 %v1313
        %v1385 = vunpack.c.l.b16 %v1314
        %v1386 = vunpack.c.l.b16 %v1315
        %v1387 = vunpack.c.l.b16 %v1316
        %v1388 = vunpack.c.l.b16 %v1317
        %v1389 = vunpack.c.l.b16 %v1318
        %v1390 = vunpack.c.l.b16 %v1319
        %v1391 = vunpack.c.l.b16 %v1320
        %v1392 = vunpack.c.l.b16 %v1321
        %v1393 = vunpack.c.l.b16 %v1322
        %v1394 = vunpack.c.l.b16 %v1323
        %v1395 = vunpack.c.l.b16 %v1324
        %v1396 = vunpack.c.l.b16 %v1325
        %v1397 = vunpack.c.l.b16 %v1326
        %v1398 = vunpack.c.l.b16 %v1327
        %v1399 = vunpack.c.l.b16 %v1328
        %v1400 = vunpack.c.l.b16 %v1329
        %v1401 = vunpack.c.l.b16 %v1330
        %v1402 = vunpack.c.l.b16 %v1331
        %v1403 = vunpack.c.l.b16 %v1332
        %v1404 = vunpack.c.l.b16 %v1333
        %v1405 = vunpack.c.l.b16 %v1334
        %v1406 = vunpack.c.l.b16 %v1335
        %v1407 = vunpack.c.l.b16 %v1336
        %v1408 = vunpack.c.l.b16 %v1337
        %v1409 = vpack.c.b16 %v1378, %v1377
        %v1410 = vpack.c.b16 %v1380, %v1379
        %v1411 = vpack.c.b16 %v1382, %v1381
        %v1412 = vpack.c.b16 %v1384, %v1383
        %v1413 = vpack.c.b16 %v1386, %v1385
        %v1414 = vpack.c.b16 %v1388, %v1387
        %v1415 = vpack.c.b16 %v1390, %v1389
        %v1416 = vpack.c.b16 %v1392, %v1391
        %v1417 = vpack.c.b16 %v1394, %v1393
        %v1418 = vpack.c.b16 %v1396, %v1395
        %v1419 = vpack.c.b16 %v1398, %v1397
        %v1420 = vpack.c.b16 %v1400, %v1399
        %v1421 = vpack.c.b16 %v1402, %v1401
        %v1422 = vpack.c.b16 %v1404, %v1403
        %v1423 = vpack.c.b16 %v1406, %v1405
        %v1424 = vpack.c.b16 %v1408, %v1407
        %1441 = vmatprep.subr.bf16.mxu0 0
        %1442 = vmatpush1.bf16.msra.mxu0 %v1409
        %1443 = vmatprep.subr.bf16.mxu0 0
        %1444 = vmatpush1.bf16.msra.mxu0 %v1410
        %1445 = vmatprep.subr.bf16.mxu0 0
        %1446 = vmatpush1.bf16.msra.mxu0 %v1411
        %1447 = vmatprep.subr.bf16.mxu0 0
        %1448 = vmatpush1.bf16.msra.mxu0 %v1412
        %1449 = vmatprep.subr.bf16.mxu0 0
        %1450 = vmatpush1.bf16.msra.mxu0 %v1413
        %1451 = vmatprep.subr.bf16.mxu0 0
        %1452 = vmatpush1.bf16.msra.mxu0 %v1414
        %1453 = vmatprep.subr.bf16.mxu0 0
        %1454 = vmatpush1.bf16.msra.mxu0 %v1415
        %1455 = vmatprep.subr.bf16.mxu0 0
        %1456 = vmatpush1.bf16.msra.mxu0 %v1416
        %1457 = vmatprep.subr.bf16.mxu0 0
        %1458 = vmatpush1.bf16.msra.mxu0 %v1417
        %1459 = vmatprep.subr.bf16.mxu0 0
        %1460 = vmatpush1.bf16.msra.mxu0 %v1418
        %1461 = vmatprep.subr.bf16.mxu0 0
        %1462 = vmatpush1.bf16.msra.mxu0 %v1419
        %1463 = vmatprep.subr.bf16.mxu0 0
        %1464 = vmatpush1.bf16.msra.mxu0 %v1420
        %1465 = vmatprep.subr.bf16.mxu0 0
        %1466 = vmatpush1.bf16.msra.mxu0 %v1421
        %1467 = vmatprep.subr.bf16.mxu0 0
        %1468 = vmatpush1.bf16.msra.mxu0 %v1422
        %1469 = vmatprep.subr.bf16.mxu0 0
        %1470 = vmatpush1.bf16.msra.mxu0 %v1423
        %1471 = vmatprep.subr.bf16.mxu0 0
        %1472 = vmatpush1.bf16.msra.mxu0 %v1424
        %1473 = vmatprep.mubr.bf16.mxu0 %v1290
        %1474 = vmatmul.mubr.bf16.gmra.mrb[0].mxu0 %v649
        %v1475 = vpop.f32.mrb[0].mxu0
        %v1476 = vadd.f32 %v1343, %v1475
        %v1477 = vpop.f32.mrb[0].mxu0
        %v1478 = vpop.f32.mrb[0].mxu0
        %v1479 = vadd.f32 %v1343, %v1478
        %v1480 = vpop.f32.mrb[0].mxu0
        %1481 = vmatprep.mubr.bf16.mxu0 %v1291
        %1482 = vmatmul.mubr.bf16.gmra.mrb[0].mxu0 %v650
        %v1483 = vpop.f32.mrb[0].mxu0
        %v1484 = vadd.f32 %v1343, %v1483
        %v1485 = vpop.f32.mrb[0].mxu0
        %v1486 = vpop.f32.mrb[0].mxu0
        %v1487 = vadd.f32 %v1343, %v1486
        %v1488 = vpop.f32.mrb[0].mxu0
        %1489 = vmatprep.mubr.bf16.mxu0 %v1292
        %1490 = vmatmul.mubr.bf16.gmra.mrb[0].mxu0 %v651
        %v1491 = vpop.f32.mrb[0].mxu0
        %v1492 = vadd.f32 %v1343, %v1491
        %v1493 = vpop.f32.mrb[0].mxu0
        %v1494 = vpop.f32.mrb[0].mxu0
        %v1495 = vadd.f32 %v1343, %v1494
        %v1496 = vpop.f32.mrb[0].mxu0
        %1497 = vmatprep.mubr.bf16.mxu0 %v1293
        %1498 = vmatmul.mubr.bf16.gmra.mrb[0].mxu0 %v652
        %v1499 = vpop.f32.mrb[0].mxu0
        %v1500 = vadd.f32 %v1343, %v1499
        %v1501 = vpop.f32.mrb[0].mxu0
        %v1502 = vpop.f32.mrb[0].mxu0
        %v1503 = vadd.f32 %v1343, %v1502
        %v1504 = vpop.f32.mrb[0].mxu0
        %1505 = vmatprep.mubr.bf16.mxu0 %v1294
        %1506 = vmatmul.mubr.bf16.gmra.mrb[0].mxu0 %v771
        %v1507 = vpop.f32.mrb[0].mxu0
        %v1508 = vadd.f32 %v1343, %v1507
        %v1509 = vpop.f32.mrb[0].mxu0
        %v1510 = vpop.f32.mrb[0].mxu0
        %v1511 = vadd.f32 %v1343, %v1510
        %v1512 = vpop.f32.mrb[0].mxu0
        %1513 = vmatprep.mubr.bf16.mxu0 %v1295
        %1514 = vmatmul.mubr.bf16.gmra.mrb[0].mxu0 %v772
        %v1515 = vpop.f32.mrb[0].mxu0
        %v1516 = vadd.f32 %v1343, %v1515
        %v1517 = vpop.f32.mrb[0].mxu0
        %v1518 = vpop.f32.mrb[0].mxu0
        %v1519 = vadd.f32 %v1343, %v1518
        %v1520 = vpop.f32.mrb[0].mxu0
        %1521 = vmatprep.mubr.bf16.mxu0 %v1296
        %1522 = vmatmul.mubr.bf16.gmra.mrb[0].mxu0 %v773
        %v1523 = vpop.f32.mrb[0].mxu0
        %v1524 = vadd.f32 %v1343, %v1523
        %v1525 = vpop.f32.mrb[0].mxu0
        %v1526 = vpop.f32.mrb[0].mxu0
        %v1527 = vadd.f32 %v1343, %v1526
        %v1528 = vpop.f32.mrb[0].mxu0
        %1529 = vmatprep.mubr.bf16.mxu0 %v1297
        %1530 = vmatmul.mubr.bf16.gmra.mrb[0].mxu0 %v774
        %v1531 = vpop.f32.mrb[0].mxu0
        %v1532 = vadd.f32 %v1343, %v1531
        %v1533 = vpop.f32.mrb[0].mxu0
        %v1534 = vpop.f32.mrb[0].mxu0
        %v1535 = vadd.f32 %v1343, %v1534
        %v1536 = vpop.f32.mrb[0].mxu0
        %1537 = vmatprep.mubr.bf16.mxu0 %v1298
        %1538 = vmatmul.mubr.bf16.gmra.mrb[0].mxu0 %v892
        %v1539 = vpop.f32.mrb[0].mxu0
        %v1540 = vadd.f32 %v1343, %v1539
        %v1541 = vpop.f32.mrb[0].mxu0
        %v1542 = vpop.f32.mrb[0].mxu0
        %v1543 = vadd.f32 %v1343, %v1542
        %v1544 = vpop.f32.mrb[0].mxu0
        %1545 = vmatprep.mubr.bf16.mxu0 %v1299
        %1546 = vmatmul.mubr.bf16.gmra.mrb[0].mxu0 %v893
        %v1547 = vpop.f32.mrb[0].mxu0
        %v1548 = vadd.f32 %v1343, %v1547
        %v1549 = vpop.f32.mrb[0].mxu0
        %v1550 = vpop.f32.mrb[0].mxu0
        %v1551 = vadd.f32 %v1343, %v1550
        %v1552 = vpop.f32.mrb[0].mxu0
        %1553 = vmatprep.mubr.bf16.mxu0 %v1300
        %1554 = vmatmul.mubr.bf16.gmra.mrb[0].mxu0 %v894
        %v1555 = vpop.f32.mrb[0].mxu0
        %v1556 = vadd.f32 %v1343, %v1555
        %v1557 = vpop.f32.mrb[0].mxu0
        %v1558 = vpop.f32.mrb[0].mxu0
        %v1559 = vadd.f32 %v1343, %v1558
        %v1560 = vpop.f32.mrb[0].mxu0
        %1561 = vmatprep.mubr.bf16.mxu0 %v1301
        %1562 = vmatmul.mubr.bf16.gmra.mrb[0].mxu0 %v895
        %v1563 = vpop.f32.mrb[0].mxu0
        %v1564 = vadd.f32 %v1343, %v1563
        %v1565 = vpop.f32.mrb[0].mxu0
        %v1566 = vpop.f32.mrb[0].mxu0
        %v1567 = vadd.f32 %v1343, %v1566
        %v1568 = vpop.f32.mrb[0].mxu0
        %1569 = vmatprep.mubr.bf16.mxu0 %v1302
        %1570 = vmatmul.mubr.bf16.gmra.mrb[0].mxu0 %v1013
        %v1571 = vpop.f32.mrb[0].mxu0
        %v1572 = vadd.f32 %v1343, %v1571
        %v1573 = vpop.f32.mrb[0].mxu0
        %v1574 = vpop.f32.mrb[0].mxu0
        %v1575 = vadd.f32 %v1343, %v1574
        %v1576 = vpop.f32.mrb[0].mxu0
        %1577 = vmatprep.mubr.bf16.mxu0 %v1303
        %1578 = vmatmul.mubr.bf16.gmra.mrb[0].mxu0 %v1014
        %v1579 = vpop.f32.mrb[0].mxu0
        %v1580 = vadd.f32 %v1343, %v1579
        %v1581 = vpop.f32.mrb[0].mxu0
        %v1582 = vpop.f32.mrb[0].mxu0
        %v1583 = vadd.f32 %v1343, %v1582
        %v1584 = vpop.f32.mrb[0].mxu0
        %1585 = vmatprep.mubr.bf16.mxu0 %v1304
        %1586 = vmatmul.mubr.bf16.gmra.mrb[0].mxu0 %v1015
        %v1587 = vpop.f32.mrb[0].mxu0
        %v1588 = vadd.f32 %v1343, %v1587
        %v1589 = vpop.f32.mrb[0].mxu0
        %v1590 = vpop.f32.mrb[0].mxu0
        %v1591 = vadd.f32 %v1343, %v1590
        %v1592 = vpop.f32.mrb[0].mxu0
        %1593 = vmatprep.mubr.bf16.mxu0 %v1305
        %1594 = vmatmul.mubr.bf16.gmra.mrb[0].mxu0 %v1016
        %v1595 = vpop.f32.mrb[0].mxu0
        %v1596 = vadd.f32 %v1343, %v1595
        %v1597 = vpop.f32.mrb[0].mxu0
        %v1598 = vpop.f32.mrb[0].mxu0
        %v1599 = vadd.f32 %v1343, %v1598
        %v1600 = vpop.f32.mrb[0].mxu0
        %1601 = vdwg.mxu0
        %v1602 = vmax.f32 %v1476, 0.0
        %v1603 = vmax.f32 %v1479, 0.0
        %v1604 = vmax.f32 %v1484, 0.0
        %v1605 = vmax.f32 %v1487, 0.0
        %v1606 = vmax.f32 %v1492, 0.0
        %v1607 = vmax.f32 %v1495, 0.0
        %v1608 = vmax.f32 %v1500, 0.0
        %v1609 = vmax.f32 %v1503, 0.0
        %v1610 = vmax.f32 %v1508, 0.0
        %v1611 = vmax.f32 %v1511, 0.0
        %v1612 = vmax.f32 %v1516, 0.0
        %v1613 = vmax.f32 %v1519, 0.0
        %v1614 = vmax.f32 %v1524, 0.0
        %v1615 = vmax.f32 %v1527, 0.0
        %v1616 = vmax.f32 %v1532, 0.0
        %v1617 = vmax.f32 %v1535, 0.0
        %v1618 = vmax.f32 %v1540, 0.0
        %v1619 = vmax.f32 %v1543, 0.0
        %v1620 = vmax.f32 %v1548, 0.0
        %v1621 = vmax.f32 %v1551, 0.0
        %v1622 = vmax.f32 %v1556, 0.0
        %v1623 = vmax.f32 %v1559, 0.0
        %v1624 = vmax.f32 %v1564, 0.0
        %v1625 = vmax.f32 %v1567, 0.0
        %v1626 = vmax.f32 %v1572, 0.0
        %v1627 = vmax.f32 %v1575, 0.0
        %v1628 = vmax.f32 %v1580, 0.0
        %v1629 = vmax.f32 %v1583, 0.0
        %v1630 = vmax.f32 %v1588, 0.0
        %v1631 = vmax.f32 %v1591, 0.0
        %v1632 = vmax.f32 %v1596, 0.0
        %v1633 = vmax.f32 %v1599, 0.0
        %v1634 = vpack.c.bf16 %v1603, %v1602
        %v1635 = vpack.c.bf16 %v1605, %v1604
        %v1636 = vpack.c.bf16 %v1607, %v1606
        %v1637 = vpack.c.bf16 %v1609, %v1608
        %v1638 = vpack.c.bf16 %v1611, %v1610
        %v1639 = vpack.c.bf16 %v1613, %v1612
        %v1640 = vpack.c.bf16 %v1615, %v1614
        %v1641 = vpack.c.bf16 %v1617, %v1616
        %v1642 = vpack.c.bf16 %v1619, %v1618
        %v1643 = vpack.c.bf16 %v1621, %v1620
        %v1644 = vpack.c.bf16 %v1623, %v1622
        %v1645 = vpack.c.bf16 %v1625, %v1624
        %v1646 = vpack.c.bf16 %v1627, %v1626
        %v1647 = vpack.c.bf16 %v1629, %v1628
        %v1648 = vpack.c.bf16 %v1631, %v1630
        %v1649 = vpack.c.bf16 %v1633, %v1632
        %1650 = vmatprep.subr.bf16.mxu0 0
        %1651 = vmatpush1.bf16.msra.mxu0 %v1634
        %1652 = vmatprep.subr.bf16.mxu0 0
        %1653 = vmatpush1.bf16.msra.mxu0 %v1635
        %1654 = vmatprep.subr.bf16.mxu0 0
        %1655 = vmatpush1.bf16.msra.mxu0 %v1636
        %1656 = vmatprep.subr.bf16.mxu0 0
        %1657 = vmatpush1.bf16.msra.mxu0 %v1637
        %1658 = vmatprep.subr.bf16.mxu0 0
        %1659 = vmatpush1.bf16.msra.mxu0 0
        %1660 = vmatprep.subr.bf16.mxu0 0
        %1661 = vmatpush1.bf16.msra.mxu0 0
        %1662 = vmatprep.subr.bf16.mxu0 0
        %1663 = vmatpush1.bf16.msra.mxu0 0
        %1664 = vmatprep.subr.bf16.mxu0 0
        %1665 = vmatpush1.bf16.msra.mxu0 0
        %1666 = vmatprep.subr.bf16.mxu0 0
        %1667 = vmatpush1.bf16.msra.mxu0 0
        %1668 = vmatprep.subr.bf16.mxu0 0
        %1669 = vmatpush1.bf16.msra.mxu0 0
        %1670 = vmatprep.subr.bf16.mxu0 0
        %1671 = vmatpush1.bf16.msra.mxu0 0
        %1672 = vmatprep.subr.bf16.mxu0 0
        %1673 = vmatpush1.bf16.msra.mxu0 0
        %1674 = vmatprep.subr.bf16.mxu0 0
        %1675 = vmatpush1.bf16.msra.mxu0 0
        %1676 = vmatprep.subr.bf16.mxu0 0
        %1677 = vmatpush1.bf16.msra.mxu0 0
        %1678 = vmatprep.subr.bf16.mxu0 0
        %1679 = vmatpush1.bf16.msra.mxu0 0
        %1680 = vmatprep.subr.bf16.mxu0 0
        %1681 = vmatpush1.bf16.msra.mxu0 0
        %1682 = vmatprep.mubr.bf16.mxu0 0
        %1683 = vmatmul.mubr.bf16.gmra.mrb[0].mxu0 %v659
        %v1684 = vpop.f32.mrb[0].mxu0
        %v1685 = vadd.f32 0.0, %v1684
        %v1686 = vpop.f32.mrb[0].mxu0
        %v1687 = vpop.f32.mrb[0].mxu0
        %v1688 = vadd.f32 0.0, %v1687
        %v1689 = vpop.f32.mrb[0].mxu0
        %1690 = vmatprep.mubr.bf16.mxu0 0
        %1691 = vmatmul.mubr.bf16.gmra.mrb[0].mxu0 %v662
        %v1692 = vpop.f32.mrb[0].mxu0
        %v1693 = vadd.f32 0.0, %v1692
        %v1694 = vpop.f32.mrb[0].mxu0
        %v1695 = vpop.f32.mrb[0].mxu0
        %v1696 = vadd.f32 0.0, %v1695
        %v1697 = vpop.f32.mrb[0].mxu0
        %1698 = vmatprep.mubr.bf16.mxu0 0
        %1699 = vmatmul.mubr.bf16.gmra.mrb[0].mxu0 %v665
        %v1700 = vpop.f32.mrb[0].mxu0
        %v1701 = vadd.f32 0.0, %v1700
        %v1702 = vpop.f32.mrb[0].mxu0
        %v1703 = vpop.f32.mrb[0].mxu0
        %v1704 = vadd.f32 0.0, %v1703
        %v1705 = vpop.f32.mrb[0].mxu0
        %1706 = vmatprep.mubr.bf16.mxu0 0
        %1707 = vmatmul.mubr.bf16.gmra.mrb[0].mxu0 %v668
        %v1708 = vpop.f32.mrb[0].mxu0
        %v1709 = vadd.f32 0.0, %v1708
        %v1710 = vpop.f32.mrb[0].mxu0
        %v1711 = vpop.f32.mrb[0].mxu0
        %v1712 = vadd.f32 0.0, %v1711
        %v1713 = vpop.f32.mrb[0].mxu0
        %1714 = vdwg.mxu0
        %1715 = vmatprep.subr.bf16.mxu0 0
        %1716 = vmatpush1.bf16.msra.mxu0 %v1638
        %1717 = vmatprep.subr.bf16.mxu0 0
        %1718 = vmatpush1.bf16.msra.mxu0 %v1639
        %1719 = vmatprep.subr.bf16.mxu0 0
        %1720 = vmatpush1.bf16.msra.mxu0 %v1640
        %1721 = vmatprep.subr.bf16.mxu0 0
        %1722 = vmatpush1.bf16.msra.mxu0 %v1641
        %1723 = vmatprep.subr.bf16.mxu0 0
        %1724 = vmatpush1.bf16.msra.mxu0 0
        %1725 = vmatprep.subr.bf16.mxu0 0
        %1726 = vmatpush1.bf16.msra.mxu0 0
        %1727 = vmatprep.subr.bf16.mxu0 0
        %1728 = vmatpush1.bf16.msra.mxu0 0
        %1729 = vmatprep.subr.bf16.mxu0 0
        %1730 = vmatpush1.bf16.msra.mxu0 0
        %1731 = vmatprep.subr.bf16.mxu0 0
        %1732 = vmatpush1.bf16.msra.mxu0 0
        %1733 = vmatprep.subr.bf16.mxu0 0
        %1734 = vmatpush1.bf16.msra.mxu0 0
        %1735 = vmatprep.subr.bf16.mxu0 0
        %1736 = vmatpush1.bf16.msra.mxu0 0
        %1737 = vmatprep.subr.bf16.mxu0 0
        %1738 = vmatpush1.bf16.msra.mxu0 0
        %1739 = vmatprep.subr.bf16.mxu0 0
        %1740 = vmatpush1.bf16.msra.mxu0 0
        %1741 = vmatprep.subr.bf16.mxu0 0
        %1742 = vmatpush1.bf16.msra.mxu0 0
        %1743 = vmatprep.subr.bf16.mxu0 0
        %1744 = vmatpush1.bf16.msra.mxu0 0
        %1745 = vmatprep.subr.bf16.mxu0 0
        %1746 = vmatpush1.bf16.msra.mxu0 0
        %1747 = vmatprep.mubr.bf16.mxu0 0
        %1748 = vmatmul.mubr.bf16.gmra.mrb[0].mxu0 %v780
        %v1749 = vpop.f32.mrb[0].mxu0
        %v1750 = vadd.f32 0.0, %v1749
        %v1751 = vpop.f32.mrb[0].mxu0
        %v1752 = vpop.f32.mrb[0].mxu0
        %v1753 = vadd.f32 0.0, %v1752
        %v1754 = vpop.f32.mrb[0].mxu0
        %1755 = vmatprep.mubr.bf16.mxu0 0
        %1756 = vmatmul.mubr.bf16.gmra.mrb[0].mxu0 %v783
        %v1757 = vpop.f32.mrb[0].mxu0
        %v1758 = vadd.f32 0.0, %v1757
        %v1759 = vpop.f32.mrb[0].mxu0
        %v1760 = vpop.f32.mrb[0].mxu0
        %v1761 = vadd.f32 0.0, %v1760
        %v1762 = vpop.f32.mrb[0].mxu0
        %1763 = vmatprep.mubr.bf16.mxu0 0
        %1764 = vmatmul.mubr.bf16.gmra.mrb[0].mxu0 %v786
        %v1765 = vpop.f32.mrb[0].mxu0
        %v1766 = vadd.f32 0.0, %v1765
        %v1767 = vpop.f32.mrb[0].mxu0
        %v1768 = vpop.f32.mrb[0].mxu0
        %v1769 = vadd.f32 0.0, %v1768
        %v1770 = vpop.f32.mrb[0].mxu0
        %1771 = vmatprep.mubr.bf16.mxu0 0
        %1772 = vmatmul.mubr.bf16.gmra.mrb[0].mxu0 %v789
        %v1773 = vpop.f32.mrb[0].mxu0
        %v1774 = vadd.f32 0.0, %v1773
        %v1775 = vpop.f32.mrb[0].mxu0
        %v1776 = vpop.f32.mrb[0].mxu0
        %v1777 = vadd.f32 0.0, %v1776
        %v1778 = vpop.f32.mrb[0].mxu0
        %1779 = vdwg.mxu0
        %1780 = vmatprep.subr.bf16.mxu0 0
        %1781 = vmatpush1.bf16.msra.mxu0 %v1642
        %1782 = vmatprep.subr.bf16.mxu0 0
        %1783 = vmatpush1.bf16.msra.mxu0 %v1643
        %1784 = vmatprep.subr.bf16.mxu0 0
        %1785 = vmatpush1.bf16.msra.mxu0 %v1644
        %1786 = vmatprep.subr.bf16.mxu0 0
        %1787 = vmatpush1.bf16.msra.mxu0 %v1645
        %1788 = vmatprep.subr.bf16.mxu0 0
        %1789 = vmatpush1.bf16.msra.mxu0 0
        %1790 = vmatprep.subr.bf16.mxu0 0
        %1791 = vmatpush1.bf16.msra.mxu0 0
        %1792 = vmatprep.subr.bf16.mxu0 0
        %1793 = vmatpush1.bf16.msra.mxu0 0
        %1794 = vmatprep.subr.bf16.mxu0 0
        %1795 = vmatpush1.bf16.msra.mxu0 0
        %1796 = vmatprep.subr.bf16.mxu0 0
        %1797 = vmatpush1.bf16.msra.mxu0 0
        %1798 = vmatprep.subr.bf16.mxu0 0
        %1799 = vmatpush1.bf16.msra.mxu0 0
        %1800 = vmatprep.subr.bf16.mxu0 0
        %1801 = vmatpush1.bf16.msra.mxu0 0
        %1802 = vmatprep.subr.bf16.mxu0 0
        %1803 = vmatpush1.bf16.msra.mxu0 0
        %1804 = vmatprep.subr.bf16.mxu0 0
        %1805 = vmatpush1.bf16.msra.mxu0 0
        %1806 = vmatprep.subr.bf16.mxu0 0
        %1807 = vmatpush1.bf16.msra.mxu0 0
        %1808 = vmatprep.subr.bf16.mxu0 0
        %1809 = vmatpush1.bf16.msra.mxu0 0
        %1810 = vmatprep.subr.bf16.mxu0 0
        %1811 = vmatpush1.bf16.msra.mxu0 0
        %1812 = vmatprep.mubr.bf16.mxu0 0
        %1813 = vmatmul.mubr.bf16.gmra.mrb[0].mxu0 %v901
        %v1814 = vpop.f32.mrb[0].mxu0
        %v1815 = vadd.f32 0.0, %v1814
        %v1816 = vpop.f32.mrb[0].mxu0
        %v1817 = vpop.f32.mrb[0].mxu0
        %v1818 = vadd.f32 0.0, %v1817
        %v1819 = vpop.f32.mrb[0].mxu0
        %1820 = vmatprep.mubr.bf16.mxu0 0
        %1821 = vmatmul.mubr.bf16.gmra.mrb[0].mxu0 %v904
        %v1822 = vpop.f32.mrb[0].mxu0
        %v1823 = vadd.f32 0.0, %v1822
        %v1824 = vpop.f32.mrb[0].mxu0
        %v1825 = vpop.f32.mrb[0].mxu0
        %v1826 = vadd.f32 0.0, %v1825
        %v1827 = vpop.f32.mrb[0].mxu0
        %1828 = vmatprep.mubr.bf16.mxu0 0
        %1829 = vmatmul.mubr.bf16.gmra.mrb[0].mxu0 %v907
        %v1830 = vpop.f32.mrb[0].mxu0
        %v1831 = vadd.f32 0.0, %v1830
        %v1832 = vpop.f32.mrb[0].mxu0
        %v1833 = vpop.f32.mrb[0].mxu0
        %v1834 = vadd.f32 0.0, %v1833
        %v1835 = vpop.f32.mrb[0].mxu0
        %1836 = vmatprep.mubr.bf16.mxu0 0
        %1837 = vmatmul.mubr.bf16.gmra.mrb[0].mxu0 %v910
        %v1838 = vpop.f32.mrb[0].mxu0
        %v1839 = vadd.f32 0.0, %v1838
        %v1840 = vpop.f32.mrb[0].mxu0
        %v1841 = vpop.f32.mrb[0].mxu0
        %v1842 = vadd.f32 0.0, %v1841
        %v1843 = vpop.f32.mrb[0].mxu0
        %1844 = vdwg.mxu0
        %1845 = vmatprep.subr.bf16.mxu0 0
        %1846 = vmatpush1.bf16.msra.mxu0 %v1646
        %1847 = vmatprep.subr.bf16.mxu0 0
        %1848 = vmatpush1.bf16.msra.mxu0 %v1647
        %1849 = vmatprep.subr.bf16.mxu0 0
        %1850 = vmatpush1.bf16.msra.mxu0 %v1648
        %1851 = vmatprep.subr.bf16.mxu0 0
        %1852 = vmatpush1.bf16.msra.mxu0 %v1649
        %1853 = vmatprep.subr.bf16.mxu0 0
        %1854 = vmatpush1.bf16.msra.mxu0 0
        %1855 = vmatprep.subr.bf16.mxu0 0
        %1856 = vmatpush1.bf16.msra.mxu0 0
        %1857 = vmatprep.subr.bf16.mxu0 0
        %1858 = vmatpush1.bf16.msra.mxu0 0
        %1859 = vmatprep.subr.bf16.mxu0 0
        %1860 = vmatpush1.bf16.msra.mxu0 0
        %1861 = vmatprep.subr.bf16.mxu0 0
        %1862 = vmatpush1.bf16.msra.mxu0 0
        %1863 = vmatprep.subr.bf16.mxu0 0
        %1864 = vmatpush1.bf16.msra.mxu0 0
        %1865 = vmatprep.subr.bf16.mxu0 0
        %1866 = vmatpush1.bf16.msra.mxu0 0
        %1867 = vmatprep.subr.bf16.mxu0 0
        %1868 = vmatpush1.bf16.msra.mxu0 0
        %1869 = vmatprep.subr.bf16.mxu0 0
        %1870 = vmatpush1.bf16.msra.mxu0 0
        %1871 = vmatprep.subr.bf16.mxu0 0
        %1872 = vmatpush1.bf16.msra.mxu0 0
        %1873 = vmatprep.subr.bf16.mxu0 0
        %1874 = vmatpush1.bf16.msra.mxu0 0
        %1875 = vmatprep.subr.bf16.mxu0 0
        %1876 = vmatpush1.bf16.msra.mxu0 0
        %1877 = vmatprep.mubr.bf16.mxu0 0
        %1878 = vmatmul.mubr.bf16.gmra.mrb[0].mxu0 %v1022
        %v1879 = vpop.f32.mrb[0].mxu0
        %v1880 = vadd.f32 0.0, %v1879
        %v1881 = vpop.f32.mrb[0].mxu0
        %v1882 = vpop.f32.mrb[0].mxu0
        %v1883 = vadd.f32 0.0, %v1882
        %v1884 = vpop.f32.mrb[0].mxu0
        %1885 = vmatprep.mubr.bf16.mxu0 0
        %1886 = vmatmul.mubr.bf16.gmra.mrb[0].mxu0 %v1025
        %v1887 = vpop.f32.mrb[0].mxu0
        %v1888 = vadd.f32 0.0, %v1887
        %v1889 = vpop.f32.mrb[0].mxu0
        %v1890 = vpop.f32.mrb[0].mxu0
        %v1891 = vadd.f32 0.0, %v1890
        %v1892 = vpop.f32.mrb[0].mxu0
        %1893 = vmatprep.mubr.bf16.mxu0 0
        %1894 = vmatmul.mubr.bf16.gmra.mrb[0].mxu0 %v1028
        %v1895 = vpop.f32.mrb[0].mxu0
        %v1896 = vadd.f32 0.0, %v1895
        %v1897 = vpop.f32.mrb[0].mxu0
        %v1898 = vpop.f32.mrb[0].mxu0
        %v1899 = vadd.f32 0.0, %v1898
        %v1900 = vpop.f32.mrb[0].mxu0
        %1901 = vmatprep.mubr.bf16.mxu0 0
        %1902 = vmatmul.mubr.bf16.gmra.mrb[0].mxu0 %v1031
        %v1903 = vpop.f32.mrb[0].mxu0
        %v1904 = vadd.f32 0.0, %v1903
        %v1905 = vpop.f32.mrb[0].mxu0
        %v1906 = vpop.f32.mrb[0].mxu0
        %v1907 = vadd.f32 0.0, %v1906
        %v1908 = vpop.f32.mrb[0].mxu0
        %1909 = vdwg.mxu0
        %v1910 = vmul.f32 %v1685, %v1101
        %v1911 = vmul.f32 %v1688, %v1106
        %v1912 = vmul.f32 %v1693, %v1111
        %v1913 = vmul.f32 %v1696, %v1116
        %v1914 = vmul.f32 %v1701, %v1121
        %v1915 = vmul.f32 %v1704, %v1126
        %v1916 = vmul.f32 %v1709, %v1131
        %v1917 = vmul.f32 %v1712, %v1136
        %v1918 = vmul.f32 %v1750, %v1141
        %v1919 = vmul.f32 %v1753, %v1146
        %v1920 = vmul.f32 %v1758, %v1151
        %v1921 = vmul.f32 %v1761, %v1156
        %v1922 = vmul.f32 %v1766, %v1161
        %v1923 = vmul.f32 %v1769, %v1166
        %v1924 = vmul.f32 %v1774, %v1171
        %v1925 = vmul.f32 %v1777, %v1176
        %v1926 = vmul.f32 %v1815, %v1181
        %v1927 = vmul.f32 %v1818, %v1186
        %v1928 = vmul.f32 %v1823, %v1191
        %v1929 = vmul.f32 %v1826, %v1196
        %v1930 = vmul.f32 %v1831, %v1201
        %v1931 = vmul.f32 %v1834, %v1206
        %v1932 = vmul.f32 %v1839, %v1211
        %v1933 = vmul.f32 %v1842, %v1216
        %v1934 = vmul.f32 %v1880, %v1221
        %v1935 = vmul.f32 %v1883, %v1226
        %v1936 = vmul.f32 %v1888, %v1231
        %v1937 = vmul.f32 %v1891, %v1236
        %v1938 = vmul.f32 %v1896, %v1241
        %v1939 = vmul.f32 %v1899, %v1246
        %v1940 = vmul.f32 %v1904, %v1251
        %v1941 = vmul.f32 %v1907, %v1256
        %v1942 = vpack.c.bf16 %v1911, %v1910
        %v1943 = vpack.c.bf16 %v1913, %v1912
        %v1944 = vpack.c.bf16 %v1915, %v1914
        %v1945 = vpack.c.bf16 %v1917, %v1916
        %v1946 = vpack.c.bf16 %v1919, %v1918
        %v1947 = vpack.c.bf16 %v1921, %v1920
        %v1948 = vpack.c.bf16 %v1923, %v1922
        %v1949 = vpack.c.bf16 %v1925, %v1924
        %v1950 = vpack.c.bf16 %v1927, %v1926
        %v1951 = vpack.c.bf16 %v1929, %v1928
        %v1952 = vpack.c.bf16 %v1931, %v1930
        %v1953 = vpack.c.bf16 %v1933, %v1932
        %v1954 = vpack.c.bf16 %v1935, %v1934
        %v1955 = vpack.c.bf16 %v1937, %v1936
        %v1956 = vpack.c.bf16 %v1939, %v1938
        %v1957 = vpack.c.bf16 %v1941, %v1940
        %v1958 = vld [vmem:[#allocation11] sm:$0xf]
        %v1959 = vld [vmem:[#allocation11 + $0x4] sm:$0xf]
        %v1960 = vld [vmem:[#allocation11 + $0x8] sm:$0xf]
        %v1961 = vld [vmem:[#allocation11 + $0xc] sm:$0xf]
        %v1962 = vld [vmem:[#allocation11 + $0x10] sm:$0xf]
        %v1963 = vld [vmem:[#allocation11 + $0x14] sm:$0xf]
        %v1964 = vld [vmem:[#allocation11 + $0x18] sm:$0xf]
        %v1965 = vld [vmem:[#allocation11 + $0x1c] sm:$0xf]
        %v1966 = vld [vmem:[#allocation11 + $0x20] sm:$0xf]
        %v1967 = vld [vmem:[#allocation11 + $0x24] sm:$0xf]
        %v1968 = vld [vmem:[#allocation11 + $0x28] sm:$0xf]
        %v1969 = vld [vmem:[#allocation11 + $0x2c] sm:$0xf]
        %v1970 = vld [vmem:[#allocation11 + $0x30] sm:$0xf]
        %v1971 = vld [vmem:[#allocation11 + $0x34] sm:$0xf]
        %v1972 = vld [vmem:[#allocation11 + $0x38] sm:$0xf]
        %v1973 = vld [vmem:[#allocation11 + $0x3c] sm:$0xf]
        %v1974 = vld [vmem:[#allocation11 + $0x40] sm:$0xf]
        %v1975 = vld [vmem:[#allocation11 + $0x44] sm:$0xf]
        %v1976 = vld [vmem:[#allocation11 + $0x48] sm:$0xf]
        %v1977 = vld [vmem:[#allocation11 + $0x4c] sm:$0xf]
        %v1978 = vld [vmem:[#allocation11 + $0x50] sm:$0xf]
        %v1979 = vld [vmem:[#allocation11 + $0x54] sm:$0xf]
        %v1980 = vld [vmem:[#allocation11 + $0x58] sm:$0xf]
        %v1981 = vld [vmem:[#allocation11 + $0x5c] sm:$0xf]
        %v1982 = vld [vmem:[#allocation11 + $0x60] sm:$0xf]
        %v1983 = vld [vmem:[#allocation11 + $0x64] sm:$0xf]
        %v1984 = vld [vmem:[#allocation11 + $0x68] sm:$0xf]
        %v1985 = vld [vmem:[#allocation11 + $0x6c] sm:$0xf]
        %v1986 = vld [vmem:[#allocation11 + $0x70] sm:$0xf]
        %v1987 = vld [vmem:[#allocation11 + $0x74] sm:$0xf]
        %v1988 = vld [vmem:[#allocation11 + $0x78] sm:$0xf]
        %v1989 = vld [vmem:[#allocation11 + $0x7c] sm:$0xf]
        %v1990 = vld [vmem:[#allocation13] sm:$0x1]
        %v1992 = vlaneseq
        %v1993 = vshrl.u32 %v1992, 7
        %v1994 = vsub.s32 0, %v1993
        %v1995 = vrot.slane %v1990, %v1994
        %v2029 = vunpack.c.l.b16 %v1958
        %v2030 = vunpack.c.l.b16 %v1959
        %v2031 = vunpack.c.l.b16 %v1960
        %v2032 = vunpack.c.l.b16 %v1961
        %v2033 = vunpack.c.l.b16 %v1962
        %v2034 = vunpack.c.l.b16 %v1963
        %v2035 = vunpack.c.l.b16 %v1964
        %v2036 = vunpack.c.l.b16 %v1965
        %v2037 = vunpack.c.l.b16 %v1966
        %v2038 = vunpack.c.l.b16 %v1967
        %v2039 = vunpack.c.l.b16 %v1968
        %v2040 = vunpack.c.l.b16 %v1969
        %v2041 = vunpack.c.l.b16 %v1970
        %v2042 = vunpack.c.l.b16 %v1971
        %v2043 = vunpack.c.l.b16 %v1972
        %v2044 = vunpack.c.l.b16 %v1973
        %v2045 = vunpack.c.l.b16 %v1974
        %v2046 = vunpack.c.l.b16 %v1975
        %v2047 = vunpack.c.l.b16 %v1976
        %v2048 = vunpack.c.l.b16 %v1977
        %v2049 = vunpack.c.l.b16 %v1978
        %v2050 = vunpack.c.l.b16 %v1979
        %v2051 = vunpack.c.l.b16 %v1980
        %v2052 = vunpack.c.l.b16 %v1981
        %v2053 = vunpack.c.l.b16 %v1982
        %v2054 = vunpack.c.l.b16 %v1983
        %v2055 = vunpack.c.l.b16 %v1984
        %v2056 = vunpack.c.l.b16 %v1985
        %v2057 = vunpack.c.l.b16 %v1986
        %v2058 = vunpack.c.l.b16 %v1987
        %v2059 = vunpack.c.l.b16 %v1988
        %v2060 = vunpack.c.l.b16 %v1989
        %v2061 = vpack.c.b16 %v2030, %v2029
        %v2062 = vpack.c.b16 %v2032, %v2031
        %v2063 = vpack.c.b16 %v2034, %v2033
        %v2064 = vpack.c.b16 %v2036, %v2035
        %v2065 = vpack.c.b16 %v2038, %v2037
        %v2066 = vpack.c.b16 %v2040, %v2039
        %v2067 = vpack.c.b16 %v2042, %v2041
        %v2068 = vpack.c.b16 %v2044, %v2043
        %v2069 = vpack.c.b16 %v2046, %v2045
        %v2070 = vpack.c.b16 %v2048, %v2047
        %v2071 = vpack.c.b16 %v2050, %v2049
        %v2072 = vpack.c.b16 %v2052, %v2051
        %v2073 = vpack.c.b16 %v2054, %v2053
        %v2074 = vpack.c.b16 %v2056, %v2055
        %v2075 = vpack.c.b16 %v2058, %v2057
        %v2076 = vpack.c.b16 %v2060, %v2059
        %2093 = vmatprep.subr.bf16.mxu0 0
        %2094 = vmatpush1.bf16.msra.mxu0 %v2061
        %2095 = vmatprep.subr.bf16.mxu0 0
        %2096 = vmatpush1.bf16.msra.mxu0 %v2062
        %2097 = vmatprep.subr.bf16.mxu0 0
        %2098 = vmatpush1.bf16.msra.mxu0 %v2063
        %2099 = vmatprep.subr.bf16.mxu0 0
        %2100 = vmatpush1.bf16.msra.mxu0 %v2064
        %2101 = vmatprep.subr.bf16.mxu0 0
        %2102 = vmatpush1.bf16.msra.mxu0 %v2065
        %2103 = vmatprep.subr.bf16.mxu0 0
        %2104 = vmatpush1.bf16.msra.mxu0 %v2066
        %2105 = vmatprep.subr.bf16.mxu0 0
        %2106 = vmatpush1.bf16.msra.mxu0 %v2067
        %2107 = vmatprep.subr.bf16.mxu0 0
        %2108 = vmatpush1.bf16.msra.mxu0 %v2068
        %2109 = vmatprep.subr.bf16.mxu0 0
        %2110 = vmatpush1.bf16.msra.mxu0 %v2069
        %2111 = vmatprep.subr.bf16.mxu0 0
        %2112 = vmatpush1.bf16.msra.mxu0 %v2070
        %2113 = vmatprep.subr.bf16.mxu0 0
        %2114 = vmatpush1.bf16.msra.mxu0 %v2071
        %2115 = vmatprep.subr.bf16.mxu0 0
        %2116 = vmatpush1.bf16.msra.mxu0 %v2072
        %2117 = vmatprep.subr.bf16.mxu0 0
        %2118 = vmatpush1.bf16.msra.mxu0 %v2073
        %2119 = vmatprep.subr.bf16.mxu0 0
        %2120 = vmatpush1.bf16.msra.mxu0 %v2074
        %2121 = vmatprep.subr.bf16.mxu0 0
        %2122 = vmatpush1.bf16.msra.mxu0 %v2075
        %2123 = vmatprep.subr.bf16.mxu0 0
        %2124 = vmatpush1.bf16.msra.mxu0 %v2076
        %2125 = vmatprep.mubr.bf16.mxu0 %v1942
        %2126 = vmatmul.mubr.bf16.gmra.mrb[0].mxu0 %v1634
        %v2127 = vpop.f32.mrb[0].mxu0
        %v2128 = vadd.f32 %v1995, %v2127
        %v2129 = vpop.f32.mrb[0].mxu0
        %v2130 = vpop.f32.mrb[0].mxu0
        %v2131 = vadd.f32 %v1995, %v2130
        %v2132 = vpop.f32.mrb[0].mxu0
        %2133 = vmatprep.mubr.bf16.mxu0 %v1943
        %2134 = vmatmul.mubr.bf16.gmra.mrb[0].mxu0 %v1635
        %v2135 = vpop.f32.mrb[0].mxu0
        %v2136 = vadd.f32 %v1995, %v2135
        %v2137 = vpop.f32.mrb[0].mxu0
        %v2138 = vpop.f32.mrb[0].mxu0
        %v2139 = vadd.f32 %v1995, %v2138
        %v2140 = vpop.f32.mrb[0].mxu0
        %2141 = vmatprep.mubr.bf16.mxu0 %v1944
        %2142 = vmatmul.mubr.bf16.gmra.mrb[0].mxu0 %v1636
        %v2143 = vpop.f32.mrb[0].mxu0
        %v2144 = vadd.f32 %v1995, %v2143
        %v2145 = vpop.f32.mrb[0].mxu0
        %v2146 = vpop.f32.mrb[0].mxu0
        %v2147 = vadd.f32 %v1995, %v2146
        %v2148 = vpop.f32.mrb[0].mxu0
        %2149 = vmatprep.mubr.bf16.mxu0 %v1945
        %2150 = vmatmul.mubr.bf16.gmra.mrb[0].mxu0 %v1637
        %v2151 = vpop.f32.mrb[0].mxu0
        %v2152 = vadd.f32 %v1995, %v2151
        %v2153 = vpop.f32.mrb[0].mxu0
        %v2154 = vpop.f32.mrb[0].mxu0
        %v2155 = vadd.f32 %v1995, %v2154
        %v2156 = vpop.f32.mrb[0].mxu0
        %2157 = vmatprep.mubr.bf16.mxu0 %v1946
        %2158 = vmatmul.mubr.bf16.gmra.mrb[0].mxu0 %v1638
        %v2159 = vpop.f32.mrb[0].mxu0
        %v2160 = vadd.f32 %v1995, %v2159
        %v2161 = vpop.f32.mrb[0].mxu0
        %v2162 = vpop.f32.mrb[0].mxu0
        %v2163 = vadd.f32 %v1995, %v2162
        %v2164 = vpop.f32.mrb[0].mxu0
        %2165 = vmatprep.mubr.bf16.mxu0 %v1947
        %2166 = vmatmul.mubr.bf16.gmra.mrb[0].mxu0 %v1639
        %v2167 = vpop.f32.mrb[0].mxu0
        %v2168 = vadd.f32 %v1995, %v2167
        %v2169 = vpop.f32.mrb[0].mxu0
        %v2170 = vpop.f32.mrb[0].mxu0
        %v2171 = vadd.f32 %v1995, %v2170
        %v2172 = vpop.f32.mrb[0].mxu0
        %2173 = vmatprep.mubr.bf16.mxu0 %v1948
        %2174 = vmatmul.mubr.bf16.gmra.mrb[0].mxu0 %v1640
        %v2175 = vpop.f32.mrb[0].mxu0
        %v2176 = vadd.f32 %v1995, %v2175
        %v2177 = vpop.f32.mrb[0].mxu0
        %v2178 = vpop.f32.mrb[0].mxu0
        %v2179 = vadd.f32 %v1995, %v2178
        %v2180 = vpop.f32.mrb[0].mxu0
        %2181 = vmatprep.mubr.bf16.mxu0 %v1949
        %2182 = vmatmul.mubr.bf16.gmra.mrb[0].mxu0 %v1641
        %v2183 = vpop.f32.mrb[0].mxu0
        %v2184 = vadd.f32 %v1995, %v2183
        %v2185 = vpop.f32.mrb[0].mxu0
        %v2186 = vpop.f32.mrb[0].mxu0
        %v2187 = vadd.f32 %v1995, %v2186
        %v2188 = vpop.f32.mrb[0].mxu0
        %2189 = vmatprep.mubr.bf16.mxu0 %v1950
        %2190 = vmatmul.mubr.bf16.gmra.mrb[0].mxu0 %v1642
        %v2191 = vpop.f32.mrb[0].mxu0
        %v2192 = vadd.f32 %v1995, %v2191
        %v2193 = vpop.f32.mrb[0].mxu0
        %v2194 = vpop.f32.mrb[0].mxu0
        %v2195 = vadd.f32 %v1995, %v2194
        %v2196 = vpop.f32.mrb[0].mxu0
        %2197 = vmatprep.mubr.bf16.mxu0 %v1951
        %2198 = vmatmul.mubr.bf16.gmra.mrb[0].mxu0 %v1643
        %v2199 = vpop.f32.mrb[0].mxu0
        %v2200 = vadd.f32 %v1995, %v2199
        %v2201 = vpop.f32.mrb[0].mxu0
        %v2202 = vpop.f32.mrb[0].mxu0
        %v2203 = vadd.f32 %v1995, %v2202
        %v2204 = vpop.f32.mrb[0].mxu0
        %2205 = vmatprep.mubr.bf16.mxu0 %v1952
        %2206 = vmatmul.mubr.bf16.gmra.mrb[0].mxu0 %v1644
        %v2207 = vpop.f32.mrb[0].mxu0
        %v2208 = vadd.f32 %v1995, %v2207
        %v2209 = vpop.f32.mrb[0].mxu0
        %v2210 = vpop.f32.mrb[0].mxu0
        %v2211 = vadd.f32 %v1995, %v2210
        %v2212 = vpop.f32.mrb[0].mxu0
        %2213 = vmatprep.mubr.bf16.mxu0 %v1953
        %2214 = vmatmul.mubr.bf16.gmra.mrb[0].mxu0 %v1645
        %v2215 = vpop.f32.mrb[0].mxu0
        %v2216 = vadd.f32 %v1995, %v2215
        %v2217 = vpop.f32.mrb[0].mxu0
        %v2218 = vpop.f32.mrb[0].mxu0
        %v2219 = vadd.f32 %v1995, %v2218
        %v2220 = vpop.f32.mrb[0].mxu0
        %2221 = vmatprep.mubr.bf16.mxu0 %v1954
        %2222 = vmatmul.mubr.bf16.gmra.mrb[0].mxu0 %v1646
        %v2223 = vpop.f32.mrb[0].mxu0
        %v2224 = vadd.f32 %v1995, %v2223
        %v2225 = vpop.f32.mrb[0].mxu0
        %v2226 = vpop.f32.mrb[0].mxu0
        %v2227 = vadd.f32 %v1995, %v2226
        %v2228 = vpop.f32.mrb[0].mxu0
        %2229 = vmatprep.mubr.bf16.mxu0 %v1955
        %2230 = vmatmul.mubr.bf16.gmra.mrb[0].mxu0 %v1647
        %v2231 = vpop.f32.mrb[0].mxu0
        %v2232 = vadd.f32 %v1995, %v2231
        %v2233 = vpop.f32.mrb[0].mxu0
        %v2234 = vpop.f32.mrb[0].mxu0
        %v2235 = vadd.f32 %v1995, %v2234
        %v2236 = vpop.f32.mrb[0].mxu0
        %2237 = vmatprep.mubr.bf16.mxu0 %v1956
        %2238 = vmatmul.mubr.bf16.gmra.mrb[0].mxu0 %v1648
        %v2239 = vpop.f32.mrb[0].mxu0
        %v2240 = vadd.f32 %v1995, %v2239
        %v2241 = vpop.f32.mrb[0].mxu0
        %v2242 = vpop.f32.mrb[0].mxu0
        %v2243 = vadd.f32 %v1995, %v2242
        %v2244 = vpop.f32.mrb[0].mxu0
        %2245 = vmatprep.mubr.bf16.mxu0 %v1957
        %2246 = vmatmul.mubr.bf16.gmra.mrb[0].mxu0 %v1649
        %v2247 = vpop.f32.mrb[0].mxu0
        %v2248 = vadd.f32 %v1995, %v2247
        %v2249 = vpop.f32.mrb[0].mxu0
        %v2250 = vpop.f32.mrb[0].mxu0
        %v2251 = vadd.f32 %v1995, %v2250
        %v2252 = vpop.f32.mrb[0].mxu0
        %2253 = vdwg.mxu0
        %v2254 = vmax.f32 %v2128, 0.0
        %v2255 = vmax.f32 %v2131, 0.0
        %v2256 = vmax.f32 %v2136, 0.0
        %v2257 = vmax.f32 %v2139, 0.0
        %v2258 = vmax.f32 %v2144, 0.0
        %v2259 = vmax.f32 %v2147, 0.0
        %v2260 = vmax.f32 %v2152, 0.0
        %v2261 = vmax.f32 %v2155, 0.0
        %v2262 = vmax.f32 %v2160, 0.0
        %v2263 = vmax.f32 %v2163, 0.0
        %v2264 = vmax.f32 %v2168, 0.0
        %v2265 = vmax.f32 %v2171, 0.0
        %v2266 = vmax.f32 %v2176, 0.0
        %v2267 = vmax.f32 %v2179, 0.0
        %v2268 = vmax.f32 %v2184, 0.0
        %v2269 = vmax.f32 %v2187, 0.0
        %v2270 = vmax.f32 %v2192, 0.0
        %v2271 = vmax.f32 %v2195, 0.0
        %v2272 = vmax.f32 %v2200, 0.0
        %v2273 = vmax.f32 %v2203, 0.0
        %v2274 = vmax.f32 %v2208, 0.0
        %v2275 = vmax.f32 %v2211, 0.0
        %v2276 = vmax.f32 %v2216, 0.0
        %v2277 = vmax.f32 %v2219, 0.0
        %v2278 = vmax.f32 %v2224, 0.0
        %v2279 = vmax.f32 %v2227, 0.0
        %v2280 = vmax.f32 %v2232, 0.0
        %v2281 = vmax.f32 %v2235, 0.0
        %v2282 = vmax.f32 %v2240, 0.0
        %v2283 = vmax.f32 %v2243, 0.0
        %v2284 = vmax.f32 %v2248, 0.0
        %v2285 = vmax.f32 %v2251, 0.0
        %v2286 = vpack.c.bf16 %v2255, %v2254
        %v2287 = vpack.c.bf16 %v2257, %v2256
        %v2288 = vpack.c.bf16 %v2259, %v2258
        %v2289 = vpack.c.bf16 %v2261, %v2260
        %v2290 = vpack.c.bf16 %v2263, %v2262
        %v2291 = vpack.c.bf16 %v2265, %v2264
        %v2292 = vpack.c.bf16 %v2267, %v2266
        %v2293 = vpack.c.bf16 %v2269, %v2268
        %v2294 = vpack.c.bf16 %v2271, %v2270
        %v2295 = vpack.c.bf16 %v2273, %v2272
        %v2296 = vpack.c.bf16 %v2275, %v2274
        %v2297 = vpack.c.bf16 %v2277, %v2276
        %v2298 = vpack.c.bf16 %v2279, %v2278
        %v2299 = vpack.c.bf16 %v2281, %v2280
        %v2300 = vpack.c.bf16 %v2283, %v2282
        %v2301 = vpack.c.bf16 %v2285, %v2284
        %2302 = vmatprep.subr.bf16.mxu0 0
        %2303 = vmatpush1.bf16.msra.mxu0 %v2286
        %2304 = vmatprep.subr.bf16.mxu0 0
        %2305 = vmatpush1.bf16.msra.mxu0 %v2287
        %2306 = vmatprep.subr.bf16.mxu0 0
        %2307 = vmatpush1.bf16.msra.mxu0 %v2288
        %2308 = vmatprep.subr.bf16.mxu0 0
        %2309 = vmatpush1.bf16.msra.mxu0 %v2289
        %2310 = vmatprep.subr.bf16.mxu0 0
        %2311 = vmatpush1.bf16.msra.mxu0 0
        %2312 = vmatprep.subr.bf16.mxu0 0
        %2313 = vmatpush1.bf16.msra.mxu0 0
        %2314 = vmatprep.subr.bf16.mxu0 0
        %2315 = vmatpush1.bf16.msra.mxu0 0
        %2316 = vmatprep.subr.bf16.mxu0 0
        %2317 = vmatpush1.bf16.msra.mxu0 0
        %2318 = vmatprep.subr.bf16.mxu0 0
        %2319 = vmatpush1.bf16.msra.mxu0 0
        %2320 = vmatprep.subr.bf16.mxu0 0
        %2321 = vmatpush1.bf16.msra.mxu0 0
        %2322 = vmatprep.subr.bf16.mxu0 0
        %2323 = vmatpush1.bf16.msra.mxu0 0
        %2324 = vmatprep.subr.bf16.mxu0 0
        %2325 = vmatpush1.bf16.msra.mxu0 0
        %2326 = vmatprep.subr.bf16.mxu0 0
        %2327 = vmatpush1.bf16.msra.mxu0 0
        %2328 = vmatprep.subr.bf16.mxu0 0
        %2329 = vmatpush1.bf16.msra.mxu0 0
        %2330 = vmatprep.subr.bf16.mxu0 0
        %2331 = vmatpush1.bf16.msra.mxu0 0
        %2332 = vmatprep.subr.bf16.mxu0 0
        %2333 = vmatpush1.bf16.msra.mxu0 0
        %2334 = vmatprep.mubr.bf16.mxu0 0
        %2335 = vmatmul.mubr.bf16.gmra.mrb[0].mxu0 %v659
        %v2336 = vpop.f32.mrb[0].mxu0
        %v2337 = vadd.f32 0.0, %v2336
        %v2338 = vpop.f32.mrb[0].mxu0
        %v2339 = vpop.f32.mrb[0].mxu0
        %v2340 = vadd.f32 0.0, %v2339
        %v2341 = vpop.f32.mrb[0].mxu0
        %2342 = vmatprep.mubr.bf16.mxu0 0
        %2343 = vmatmul.mubr.bf16.gmra.mrb[0].mxu0 %v662
        %v2344 = vpop.f32.mrb[0].mxu0
        %v2345 = vadd.f32 0.0, %v2344
        %v2346 = vpop.f32.mrb[0].mxu0
        %v2347 = vpop.f32.mrb[0].mxu0
        %v2348 = vadd.f32 0.0, %v2347
        %v2349 = vpop.f32.mrb[0].mxu0
        %2350 = vmatprep.mubr.bf16.mxu0 0
        %2351 = vmatmul.mubr.bf16.gmra.mrb[0].mxu0 %v665
        %v2352 = vpop.f32.mrb[0].mxu0
        %v2353 = vadd.f32 0.0, %v2352
        %v2354 = vpop.f32.mrb[0].mxu0
        %v2355 = vpop.f32.mrb[0].mxu0
        %v2356 = vadd.f32 0.0, %v2355
        %v2357 = vpop.f32.mrb[0].mxu0
        %2358 = vmatprep.mubr.bf16.mxu0 0
        %2359 = vmatmul.mubr.bf16.gmra.mrb[0].mxu0 %v668
        %v2360 = vpop.f32.mrb[0].mxu0
        %v2361 = vadd.f32 0.0, %v2360
        %v2362 = vpop.f32.mrb[0].mxu0
        %v2363 = vpop.f32.mrb[0].mxu0
        %v2364 = vadd.f32 0.0, %v2363
        %v2365 = vpop.f32.mrb[0].mxu0
        %2366 = vdwg.mxu0
        %2367 = vmatprep.subr.bf16.mxu0 0
        %2368 = vmatpush1.bf16.msra.mxu0 %v2290
        %2369 = vmatprep.subr.bf16.mxu0 0
        %2370 = vmatpush1.bf16.msra.mxu0 %v2291
        %2371 = vmatprep.subr.bf16.mxu0 0
        %2372 = vmatpush1.bf16.msra.mxu0 %v2292
        %2373 = vmatprep.subr.bf16.mxu0 0
        %2374 = vmatpush1.bf16.msra.mxu0 %v2293
        %2375 = vmatprep.subr.bf16.mxu0 0
        %2376 = vmatpush1.bf16.msra.mxu0 0
        %2377 = vmatprep.subr.bf16.mxu0 0
        %2378 = vmatpush1.bf16.msra.mxu0 0
        %2379 = vmatprep.subr.bf16.mxu0 0
        %2380 = vmatpush1.bf16.msra.mxu0 0
        %2381 = vmatprep.subr.bf16.mxu0 0
        %2382 = vmatpush1.bf16.msra.mxu0 0
        %2383 = vmatprep.subr.bf16.mxu0 0
        %2384 = vmatpush1.bf16.msra.mxu0 0
        %2385 = vmatprep.subr.bf16.mxu0 0
        %2386 = vmatpush1.bf16.msra.mxu0 0
        %2387 = vmatprep.subr.bf16.mxu0 0
        %2388 = vmatpush1.bf16.msra.mxu0 0
        %2389 = vmatprep.subr.bf16.mxu0 0
        %2390 = vmatpush1.bf16.msra.mxu0 0
        %2391 = vmatprep.subr.bf16.mxu0 0
        %2392 = vmatpush1.bf16.msra.mxu0 0
        %2393 = vmatprep.subr.bf16.mxu0 0
        %2394 = vmatpush1.bf16.msra.mxu0 0
        %2395 = vmatprep.subr.bf16.mxu0 0
        %2396 = vmatpush1.bf16.msra.mxu0 0
        %2397 = vmatprep.subr.bf16.mxu0 0
        %2398 = vmatpush1.bf16.msra.mxu0 0
        %2399 = vmatprep.mubr.bf16.mxu0 0
        %2400 = vmatmul.mubr.bf16.gmra.mrb[0].mxu0 %v780
        %v2401 = vpop.f32.mrb[0].mxu0
        %v2402 = vadd.f32 0.0, %v2401
        %v2403 = vpop.f32.mrb[0].mxu0
        %v2404 = vpop.f32.mrb[0].mxu0
        %v2405 = vadd.f32 0.0, %v2404
        %v2406 = vpop.f32.mrb[0].mxu0
        %2407 = vmatprep.mubr.bf16.mxu0 0
        %2408 = vmatmul.mubr.bf16.gmra.mrb[0].mxu0 %v783
        %v2409 = vpop.f32.mrb[0].mxu0
        %v2410 = vadd.f32 0.0, %v2409
        %v2411 = vpop.f32.mrb[0].mxu0
        %v2412 = vpop.f32.mrb[0].mxu0
        %v2413 = vadd.f32 0.0, %v2412
        %v2414 = vpop.f32.mrb[0].mxu0
        %2415 = vmatprep.mubr.bf16.mxu0 0
        %2416 = vmatmul.mubr.bf16.gmra.mrb[0].mxu0 %v786
        %v2417 = vpop.f32.mrb[0].mxu0
        %v2418 = vadd.f32 0.0, %v2417
        %v2419 = vpop.f32.mrb[0].mxu0
        %v2420 = vpop.f32.mrb[0].mxu0
        %v2421 = vadd.f32 0.0, %v2420
        %v2422 = vpop.f32.mrb[0].mxu0
        %2423 = vmatprep.mubr.bf16.mxu0 0
        %2424 = vmatmul.mubr.bf16.gmra.mrb[0].mxu0 %v789
        %v2425 = vpop.f32.mrb[0].mxu0
        %v2426 = vadd.f32 0.0, %v2425
        %v2427 = vpop.f32.mrb[0].mxu0
        %v2428 = vpop.f32.mrb[0].mxu0
        %v2429 = vadd.f32 0.0, %v2428
        %v2430 = vpop.f32.mrb[0].mxu0
        %2431 = vdwg.mxu0
        %2432 = vmatprep.subr.bf16.mxu0 0
        %2433 = vmatpush1.bf16.msra.mxu0 %v2294
        %2434 = vmatprep.subr.bf16.mxu0 0
        %2435 = vmatpush1.bf16.msra.mxu0 %v2295
        %2436 = vmatprep.subr.bf16.mxu0 0
        %2437 = vmatpush1.bf16.msra.mxu0 %v2296
        %2438 = vmatprep.subr.bf16.mxu0 0
        %2439 = vmatpush1.bf16.msra.mxu0 %v2297
        %2440 = vmatprep.subr.bf16.mxu0 0
        %2441 = vmatpush1.bf16.msra.mxu0 0
        %2442 = vmatprep.subr.bf16.mxu0 0
        %2443 = vmatpush1.bf16.msra.mxu0 0
        %2444 = vmatprep.subr.bf16.mxu0 0
        %2445 = vmatpush1.bf16.msra.mxu0 0
        %2446 = vmatprep.subr.bf16.mxu0 0
        %2447 = vmatpush1.bf16.msra.mxu0 0
        %2448 = vmatprep.subr.bf16.mxu0 0
        %2449 = vmatpush1.bf16.msra.mxu0 0
        %2450 = vmatprep.subr.bf16.mxu0 0
        %2451 = vmatpush1.bf16.msra.mxu0 0
        %2452 = vmatprep.subr.bf16.mxu0 0
        %2453 = vmatpush1.bf16.msra.mxu0 0
        %2454 = vmatprep.subr.bf16.mxu0 0
        %2455 = vmatpush1.bf16.msra.mxu0 0
        %2456 = vmatprep.subr.bf16.mxu0 0
        %2457 = vmatpush1.bf16.msra.mxu0 0
        %2458 = vmatprep.subr.bf16.mxu0 0
        %2459 = vmatpush1.bf16.msra.mxu0 0
        %2460 = vmatprep.subr.bf16.mxu0 0
        %2461 = vmatpush1.bf16.msra.mxu0 0
        %2462 = vmatprep.subr.bf16.mxu0 0
        %2463 = vmatpush1.bf16.msra.mxu0 0
        %2464 = vmatprep.mubr.bf16.mxu0 0
        %2465 = vmatmul.mubr.bf16.gmra.mrb[0].mxu0 %v901
        %v2466 = vpop.f32.mrb[0].mxu0
        %v2467 = vadd.f32 0.0, %v2466
        %v2468 = vpop.f32.mrb[0].mxu0
        %v2469 = vpop.f32.mrb[0].mxu0
        %v2470 = vadd.f32 0.0, %v2469
        %v2471 = vpop.f32.mrb[0].mxu0
        %2472 = vmatprep.mubr.bf16.mxu0 0
        %2473 = vmatmul.mubr.bf16.gmra.mrb[0].mxu0 %v904
        %v2474 = vpop.f32.mrb[0].mxu0
        %v2475 = vadd.f32 0.0, %v2474
        %v2476 = vpop.f32.mrb[0].mxu0
        %v2477 = vpop.f32.mrb[0].mxu0
        %v2478 = vadd.f32 0.0, %v2477
        %v2479 = vpop.f32.mrb[0].mxu0
        %2480 = vmatprep.mubr.bf16.mxu0 0
        %2481 = vmatmul.mubr.bf16.gmra.mrb[0].mxu0 %v907
        %v2482 = vpop.f32.mrb[0].mxu0
        %v2483 = vadd.f32 0.0, %v2482
        %v2484 = vpop.f32.mrb[0].mxu0
        %v2485 = vpop.f32.mrb[0].mxu0
        %v2486 = vadd.f32 0.0, %v2485
        %v2487 = vpop.f32.mrb[0].mxu0
        %2488 = vmatprep.mubr.bf16.mxu0 0
        %2489 = vmatmul.mubr.bf16.gmra.mrb[0].mxu0 %v910
        %v2490 = vpop.f32.mrb[0].mxu0
        %v2491 = vadd.f32 0.0, %v2490
        %v2492 = vpop.f32.mrb[0].mxu0
        %v2493 = vpop.f32.mrb[0].mxu0
        %v2494 = vadd.f32 0.0, %v2493
        %v2495 = vpop.f32.mrb[0].mxu0
        %2496 = vdwg.mxu0
        %2497 = vmatprep.subr.bf16.mxu0 0
        %2498 = vmatpush1.bf16.msra.mxu0 %v2298
        %2499 = vmatprep.subr.bf16.mxu0 0
        %2500 = vmatpush1.bf16.msra.mxu0 %v2299
        %2501 = vmatprep.subr.bf16.mxu0 0
        %2502 = vmatpush1.bf16.msra.mxu0 %v2300
        %2503 = vmatprep.subr.bf16.mxu0 0
        %2504 = vmatpush1.bf16.msra.mxu0 %v2301
        %2505 = vmatprep.subr.bf16.mxu0 0
        %2506 = vmatpush1.bf16.msra.mxu0 0
        %2507 = vmatprep.subr.bf16.mxu0 0
        %2508 = vmatpush1.bf16.msra.mxu0 0
        %2509 = vmatprep.subr.bf16.mxu0 0
        %2510 = vmatpush1.bf16.msra.mxu0 0
        %2511 = vmatprep.subr.bf16.mxu0 0
        %2512 = vmatpush1.bf16.msra.mxu0 0
        %2513 = vmatprep.subr.bf16.mxu0 0
        %2514 = vmatpush1.bf16.msra.mxu0 0
        %2515 = vmatprep.subr.bf16.mxu0 0
        %2516 = vmatpush1.bf16.msra.mxu0 0
        %2517 = vmatprep.subr.bf16.mxu0 0
        %2518 = vmatpush1.bf16.msra.mxu0 0
        %2519 = vmatprep.subr.bf16.mxu0 0
        %2520 = vmatpush1.bf16.msra.mxu0 0
        %2521 = vmatprep.subr.bf16.mxu0 0
        %2522 = vmatpush1.bf16.msra.mxu0 0
        %2523 = vmatprep.subr.bf16.mxu0 0
        %2524 = vmatpush1.bf16.msra.mxu0 0
        %2525 = vmatprep.subr.bf16.mxu0 0
        %2526 = vmatpush1.bf16.msra.mxu0 0
        %2527 = vmatprep.subr.bf16.mxu0 0
        %2528 = vmatpush1.bf16.msra.mxu0 0
        %2529 = vmatprep.mubr.bf16.mxu0 0
        %2530 = vmatmul.mubr.bf16.gmra.mrb[0].mxu0 %v1022
        %v2531 = vpop.f32.mrb[0].mxu0
        %v2532 = vadd.f32 0.0, %v2531
        %v2533 = vpop.f32.mrb[0].mxu0
        %v2534 = vpop.f32.mrb[0].mxu0
        %v2535 = vadd.f32 0.0, %v2534
        %v2536 = vpop.f32.mrb[0].mxu0
        %2537 = vmatprep.mubr.bf16.mxu0 0
        %2538 = vmatmul.mubr.bf16.gmra.mrb[0].mxu0 %v1025
        %v2539 = vpop.f32.mrb[0].mxu0
        %v2540 = vadd.f32 0.0, %v2539
        %v2541 = vpop.f32.mrb[0].mxu0
        %v2542 = vpop.f32.mrb[0].mxu0
        %v2543 = vadd.f32 0.0, %v2542
        %v2544 = vpop.f32.mrb[0].mxu0
        %2545 = vmatprep.mubr.bf16.mxu0 0
        %2546 = vmatmul.mubr.bf16.gmra.mrb[0].mxu0 %v1028
        %v2547 = vpop.f32.mrb[0].mxu0
        %v2548 = vadd.f32 0.0, %v2547
        %v2549 = vpop.f32.mrb[0].mxu0
        %v2550 = vpop.f32.mrb[0].mxu0
        %v2551 = vadd.f32 0.0, %v2550
        %v2552 = vpop.f32.mrb[0].mxu0
        %2553 = vmatprep.mubr.bf16.mxu0 0
        %2554 = vmatmul.mubr.bf16.gmra.mrb[0].mxu0 %v1031
        %v2555 = vpop.f32.mrb[0].mxu0
        %v2556 = vadd.f32 0.0, %v2555
        %v2557 = vpop.f32.mrb[0].mxu0
        %v2558 = vpop.f32.mrb[0].mxu0
        %v2559 = vadd.f32 0.0, %v2558
        %v2560 = vpop.f32.mrb[0].mxu0
        %2561 = vdwg.mxu0
        %v2562 = vmul.f32 %v2337, %v1101
        %v2563 = vmul.f32 %v2340, %v1106
        %v2564 = vmul.f32 %v2345, %v1111
        %v2565 = vmul.f32 %v2348, %v1116
        %v2566 = vmul.f32 %v2353, %v1121
        %v2567 = vmul.f32 %v2356, %v1126
        %v2568 = vmul.f32 %v2361, %v1131
        %v2569 = vmul.f32 %v2364, %v1136
        %v2570 = vmul.f32 %v2402, %v1141
        %v2571 = vmul.f32 %v2405, %v1146
        %v2572 = vmul.f32 %v2410, %v1151
        %v2573 = vmul.f32 %v2413, %v1156
        %v2574 = vmul.f32 %v2418, %v1161
        %v2575 = vmul.f32 %v2421, %v1166
        %v2576 = vmul.f32 %v2426, %v1171
        %v2577 = vmul.f32 %v2429, %v1176
        %v2578 = vmul.f32 %v2467, %v1181
        %v2579 = vmul.f32 %v2470, %v1186
        %v2580 = vmul.f32 %v2475, %v1191
        %v2581 = vmul.f32 %v2478, %v1196
        %v2582 = vmul.f32 %v2483, %v1201
        %v2583 = vmul.f32 %v2486, %v1206
        %v2584 = vmul.f32 %v2491, %v1211
        %v2585 = vmul.f32 %v2494, %v1216
        %v2586 = vmul.f32 %v2532, %v1221
        %v2587 = vmul.f32 %v2535, %v1226
        %v2588 = vmul.f32 %v2540, %v1231
        %v2589 = vmul.f32 %v2543, %v1236
        %v2590 = vmul.f32 %v2548, %v1241
        %v2591 = vmul.f32 %v2551, %v1246
        %v2592 = vmul.f32 %v2556, %v1251
        %v2593 = vmul.f32 %v2559, %v1256
        %v2594 = vpack.c.bf16 %v2563, %v2562
        %v2595 = vpack.c.bf16 %v2565, %v2564
        %v2596 = vpack.c.bf16 %v2567, %v2566
        %v2597 = vpack.c.bf16 %v2569, %v2568
        %v2598 = vpack.c.bf16 %v2571, %v2570
        %v2599 = vpack.c.bf16 %v2573, %v2572
        %v2600 = vpack.c.bf16 %v2575, %v2574
        %v2601 = vpack.c.bf16 %v2577, %v2576
        %v2602 = vpack.c.bf16 %v2579, %v2578
        %v2603 = vpack.c.bf16 %v2581, %v2580
        %v2604 = vpack.c.bf16 %v2583, %v2582
        %v2605 = vpack.c.bf16 %v2585, %v2584
        %v2606 = vpack.c.bf16 %v2587, %v2586
        %v2607 = vpack.c.bf16 %v2589, %v2588
        %v2608 = vpack.c.bf16 %v2591, %v2590
        %v2609 = vpack.c.bf16 %v2593, %v2592
        %v2610 = vld [vmem:[#allocation14] sm:$0xf]
        %v2611 = vld [vmem:[#allocation14 + $0x4] sm:$0xf]
        %v2612 = vld [vmem:[#allocation14 + $0x8] sm:$0xf]
        %v2613 = vld [vmem:[#allocation14 + $0xc] sm:$0xf]
        %v2614 = vld [vmem:[#allocation14 + $0x10] sm:$0xf]
        %v2615 = vld [vmem:[#allocation14 + $0x14] sm:$0xf]
        %v2616 = vld [vmem:[#allocation14 + $0x18] sm:$0xf]
        %v2617 = vld [vmem:[#allocation14 + $0x1c] sm:$0xf]
        %v2618 = vld [vmem:[#allocation14 + $0x20] sm:$0xf]
        %v2619 = vld [vmem:[#allocation14 + $0x24] sm:$0xf]
        %v2620 = vld [vmem:[#allocation14 + $0x28] sm:$0xf]
        %v2621 = vld [vmem:[#allocation14 + $0x2c] sm:$0xf]
        %v2622 = vld [vmem:[#allocation14 + $0x30] sm:$0xf]
        %v2623 = vld [vmem:[#allocation14 + $0x34] sm:$0xf]
        %v2624 = vld [vmem:[#allocation14 + $0x38] sm:$0xf]
        %v2625 = vld [vmem:[#allocation14 + $0x3c] sm:$0xf]
        %v2626 = vld [vmem:[#allocation14 + $0x40] sm:$0xf]
        %v2627 = vld [vmem:[#allocation14 + $0x44] sm:$0xf]
        %v2628 = vld [vmem:[#allocation14 + $0x48] sm:$0xf]
        %v2629 = vld [vmem:[#allocation14 + $0x4c] sm:$0xf]
        %v2630 = vld [vmem:[#allocation14 + $0x50] sm:$0xf]
        %v2631 = vld [vmem:[#allocation14 + $0x54] sm:$0xf]
        %v2632 = vld [vmem:[#allocation14 + $0x58] sm:$0xf]
        %v2633 = vld [vmem:[#allocation14 + $0x5c] sm:$0xf]
        %v2634 = vld [vmem:[#allocation14 + $0x60] sm:$0xf]
        %v2635 = vld [vmem:[#allocation14 + $0x64] sm:$0xf]
        %v2636 = vld [vmem:[#allocation14 + $0x68] sm:$0xf]
        %v2637 = vld [vmem:[#allocation14 + $0x6c] sm:$0xf]
        %v2638 = vld [vmem:[#allocation14 + $0x70] sm:$0xf]
        %v2639 = vld [vmem:[#allocation14 + $0x74] sm:$0xf]
        %v2640 = vld [vmem:[#allocation14 + $0x78] sm:$0xf]
        %v2641 = vld [vmem:[#allocation14 + $0x7c] sm:$0xf]
        %v2642 = vld [vmem:[#allocation16] sm:$0x1]
        %v2644 = vlaneseq
        %v2645 = vshrl.u32 %v2644, 7
        %v2646 = vsub.s32 0, %v2645
        %v2647 = vrot.slane %v2642, %v2646
        %v2681 = vunpack.c.l.b16 %v2610
        %v2682 = vunpack.c.l.b16 %v2611
        %v2683 = vunpack.c.l.b16 %v2612
        %v2684 = vunpack.c.l.b16 %v2613
        %v2685 = vunpack.c.l.b16 %v2614
        %v2686 = vunpack.c.l.b16 %v2615
        %v2687 = vunpack.c.l.b16 %v2616
        %v2688 = vunpack.c.l.b16 %v2617
        %v2689 = vunpack.c.l.b16 %v2618
        %v2690 = vunpack.c.l.b16 %v2619
        %v2691 = vunpack.c.l.b16 %v2620
        %v2692 = vunpack.c.l.b16 %v2621
        %v2693 = vunpack.c.l.b16 %v2622
        %v2694 = vunpack.c.l.b16 %v2623
        %v2695 = vunpack.c.l.b16 %v2624
        %v2696 = vunpack.c.l.b16 %v2625
        %v2697 = vunpack.c.l.b16 %v2626
        %v2698 = vunpack.c.l.b16 %v2627
        %v2699 = vunpack.c.l.b16 %v2628
        %v2700 = vunpack.c.l.b16 %v2629
        %v2701 = vunpack.c.l.b16 %v2630
        %v2702 = vunpack.c.l.b16 %v2631
        %v2703 = vunpack.c.l.b16 %v2632
        %v2704 = vunpack.c.l.b16 %v2633
        %v2705 = vunpack.c.l.b16 %v2634
        %v2706 = vunpack.c.l.b16 %v2635
        %v2707 = vunpack.c.l.b16 %v2636
        %v2708 = vunpack.c.l.b16 %v2637
        %v2709 = vunpack.c.l.b16 %v2638
        %v2710 = vunpack.c.l.b16 %v2639
        %v2711 = vunpack.c.l.b16 %v2640
        %v2712 = vunpack.c.l.b16 %v2641
        %v2713 = vpack.c.b16 %v2682, %v2681
        %v2714 = vpack.c.b16 %v2684, %v2683
        %v2715 = vpack.c.b16 %v2686, %v2685
        %v2716 = vpack.c.b16 %v2688, %v2687
        %v2717 = vpack.c.b16 %v2690, %v2689
        %v2718 = vpack.c.b16 %v2692, %v2691
        %v2719 = vpack.c.b16 %v2694, %v2693
        %v2720 = vpack.c.b16 %v2696, %v2695
        %v2721 = vpack.c.b16 %v2698, %v2697
        %v2722 = vpack.c.b16 %v2700, %v2699
        %v2723 = vpack.c.b16 %v2702, %v2701
        %v2724 = vpack.c.b16 %v2704, %v2703
        %v2725 = vpack.c.b16 %v2706, %v2705
        %v2726 = vpack.c.b16 %v2708, %v2707
        %v2727 = vpack.c.b16 %v2710, %v2709
        %v2728 = vpack.c.b16 %v2712, %v2711
        %2745 = vmatprep.subr.bf16.mxu0 0
        %2746 = vmatpush1.bf16.msra.mxu0 %v2713
        %2747 = vmatprep.subr.bf16.mxu0 0
        %2748 = vmatpush1.bf16.msra.mxu0 %v2714
        %2749 = vmatprep.subr.bf16.mxu0 0
        %2750 = vmatpush1.bf16.msra.mxu0 %v2715
        %2751 = vmatprep.subr.bf16.mxu0 0
        %2752 = vmatpush1.bf16.msra.mxu0 %v2716
        %2753 = vmatprep.subr.bf16.mxu0 0
        %2754 = vmatpush1.bf16.msra.mxu0 %v2717
        %2755 = vmatprep.subr.bf16.mxu0 0
        %2756 = vmatpush1.bf16.msra.mxu0 %v2718
        %2757 = vmatprep.subr.bf16.mxu0 0
        %2758 = vmatpush1.bf16.msra.mxu0 %v2719
        %2759 = vmatprep.subr.bf16.mxu0 0
        %2760 = vmatpush1.bf16.msra.mxu0 %v2720
        %2761 = vmatprep.subr.bf16.mxu0 0
        %2762 = vmatpush1.bf16.msra.mxu0 %v2721
        %2763 = vmatprep.subr.bf16.mxu0 0
        %2764 = vmatpush1.bf16.msra.mxu0 %v2722
        %2765 = vmatprep.subr.bf16.mxu0 0
        %2766 = vmatpush1.bf16.msra.mxu0 %v2723
        %2767 = vmatprep.subr.bf16.mxu0 0
        %2768 = vmatpush1.bf16.msra.mxu0 %v2724
        %2769 = vmatprep.subr.bf16.mxu0 0
        %2770 = vmatpush1.bf16.msra.mxu0 %v2725
        %2771 = vmatprep.subr.bf16.mxu0 0
        %2772 = vmatpush1.bf16.msra.mxu0 %v2726
        %2773 = vmatprep.subr.bf16.mxu0 0
        %2774 = vmatpush1.bf16.msra.mxu0 %v2727
        %2775 = vmatprep.subr.bf16.mxu0 0
        %2776 = vmatpush1.bf16.msra.mxu0 %v2728
        %2777 = vmatprep.mubr.bf16.mxu0 %v2594
        %2778 = vmatmul.mubr.bf16.gmra.mrb[0].mxu0 %v2286
        %v2779 = vpop.f32.mrb[0].mxu0
        %v2780 = vadd.f32 %v2647, %v2779
        %v2781 = vpop.f32.mrb[0].mxu0
        %v2782 = vpop.f32.mrb[0].mxu0
        %v2783 = vadd.f32 %v2647, %v2782
        %v2784 = vpop.f32.mrb[0].mxu0
        %2785 = vmatprep.mubr.bf16.mxu0 %v2595
        %2786 = vmatmul.mubr.bf16.gmra.mrb[0].mxu0 %v2287
        %v2787 = vpop.f32.mrb[0].mxu0
        %v2788 = vadd.f32 %v2647, %v2787
        %v2789 = vpop.f32.mrb[0].mxu0
        %v2790 = vpop.f32.mrb[0].mxu0
        %v2791 = vadd.f32 %v2647, %v2790
        %v2792 = vpop.f32.mrb[0].mxu0
        %2793 = vmatprep.mubr.bf16.mxu0 %v2596
        %2794 = vmatmul.mubr.bf16.gmra.mrb[0].mxu0 %v2288
        %v2795 = vpop.f32.mrb[0].mxu0
        %v2796 = vadd.f32 %v2647, %v2795
        %v2797 = vpop.f32.mrb[0].mxu0
        %v2798 = vpop.f32.mrb[0].mxu0
        %v2799 = vadd.f32 %v2647, %v2798
        %v2800 = vpop.f32.mrb[0].mxu0
        %2801 = vmatprep.mubr.bf16.mxu0 %v2597
        %2802 = vmatmul.mubr.bf16.gmra.mrb[0].mxu0 %v2289
        %v2803 = vpop.f32.mrb[0].mxu0
        %v2804 = vadd.f32 %v2647, %v2803
        %v2805 = vpop.f32.mrb[0].mxu0
        %v2806 = vpop.f32.mrb[0].mxu0
        %v2807 = vadd.f32 %v2647, %v2806
        %v2808 = vpop.f32.mrb[0].mxu0
        %2809 = vmatprep.mubr.bf16.mxu0 %v2598
        %2810 = vmatmul.mubr.bf16.gmra.mrb[0].mxu0 %v2290
        %v2811 = vpop.f32.mrb[0].mxu0
        %v2812 = vadd.f32 %v2647, %v2811
        %v2813 = vpop.f32.mrb[0].mxu0
        %v2814 = vpop.f32.mrb[0].mxu0
        %v2815 = vadd.f32 %v2647, %v2814
        %v2816 = vpop.f32.mrb[0].mxu0
        %2817 = vmatprep.mubr.bf16.mxu0 %v2599
        %2818 = vmatmul.mubr.bf16.gmra.mrb[0].mxu0 %v2291
        %v2819 = vpop.f32.mrb[0].mxu0
        %v2820 = vadd.f32 %v2647, %v2819
        %v2821 = vpop.f32.mrb[0].mxu0
        %v2822 = vpop.f32.mrb[0].mxu0
        %v2823 = vadd.f32 %v2647, %v2822
        %v2824 = vpop.f32.mrb[0].mxu0
        %2825 = vmatprep.mubr.bf16.mxu0 %v2600
        %2826 = vmatmul.mubr.bf16.gmra.mrb[0].mxu0 %v2292
        %v2827 = vpop.f32.mrb[0].mxu0
        %v2828 = vadd.f32 %v2647, %v2827
        %v2829 = vpop.f32.mrb[0].mxu0
        %v2830 = vpop.f32.mrb[0].mxu0
        %v2831 = vadd.f32 %v2647, %v2830
        %v2832 = vpop.f32.mrb[0].mxu0
        %2833 = vmatprep.mubr.bf16.mxu0 %v2601
        %2834 = vmatmul.mubr.bf16.gmra.mrb[0].mxu0 %v2293
        %v2835 = vpop.f32.mrb[0].mxu0
        %v2836 = vadd.f32 %v2647, %v2835
        %v2837 = vpop.f32.mrb[0].mxu0
        %v2838 = vpop.f32.mrb[0].mxu0
        %v2839 = vadd.f32 %v2647, %v2838
        %v2840 = vpop.f32.mrb[0].mxu0
        %2841 = vmatprep.mubr.bf16.mxu0 %v2602
        %2842 = vmatmul.mubr.bf16.gmra.mrb[0].mxu0 %v2294
        %v2843 = vpop.f32.mrb[0].mxu0
        %v2844 = vadd.f32 %v2647, %v2843
        %v2845 = vpop.f32.mrb[0].mxu0
        %v2846 = vpop.f32.mrb[0].mxu0
        %v2847 = vadd.f32 %v2647, %v2846
        %v2848 = vpop.f32.mrb[0].mxu0
        %2849 = vmatprep.mubr.bf16.mxu0 %v2603
        %2850 = vmatmul.mubr.bf16.gmra.mrb[0].mxu0 %v2295
        %v2851 = vpop.f32.mrb[0].mxu0
        %v2852 = vadd.f32 %v2647, %v2851
        %v2853 = vpop.f32.mrb[0].mxu0
        %v2854 = vpop.f32.mrb[0].mxu0
        %v2855 = vadd.f32 %v2647, %v2854
        %v2856 = vpop.f32.mrb[0].mxu0
        %2857 = vmatprep.mubr.bf16.mxu0 %v2604
        %2858 = vmatmul.mubr.bf16.gmra.mrb[0].mxu0 %v2296
        %v2859 = vpop.f32.mrb[0].mxu0
        %v2860 = vadd.f32 %v2647, %v2859
        %v2861 = vpop.f32.mrb[0].mxu0
        %v2862 = vpop.f32.mrb[0].mxu0
        %v2863 = vadd.f32 %v2647, %v2862
        %v2864 = vpop.f32.mrb[0].mxu0
        %2865 = vmatprep.mubr.bf16.mxu0 %v2605
        %2866 = vmatmul.mubr.bf16.gmra.mrb[0].mxu0 %v2297
        %v2867 = vpop.f32.mrb[0].mxu0
        %v2868 = vadd.f32 %v2647, %v2867
        %v2869 = vpop.f32.mrb[0].mxu0
        %v2870 = vpop.f32.mrb[0].mxu0
        %v2871 = vadd.f32 %v2647, %v2870
        %v2872 = vpop.f32.mrb[0].mxu0
        %2873 = vmatprep.mubr.bf16.mxu0 %v2606
        %2874 = vmatmul.mubr.bf16.gmra.mrb[0].mxu0 %v2298
        %v2875 = vpop.f32.mrb[0].mxu0
        %v2876 = vadd.f32 %v2647, %v2875
        %v2877 = vpop.f32.mrb[0].mxu0
        %v2878 = vpop.f32.mrb[0].mxu0
        %v2879 = vadd.f32 %v2647, %v2878
        %v2880 = vpop.f32.mrb[0].mxu0
        %2881 = vmatprep.mubr.bf16.mxu0 %v2607
        %2882 = vmatmul.mubr.bf16.gmra.mrb[0].mxu0 %v2299
        %v2883 = vpop.f32.mrb[0].mxu0
        %v2884 = vadd.f32 %v2647, %v2883
        %v2885 = vpop.f32.mrb[0].mxu0
        %v2886 = vpop.f32.mrb[0].mxu0
        %v2887 = vadd.f32 %v2647, %v2886
        %v2888 = vpop.f32.mrb[0].mxu0
        %2889 = vmatprep.mubr.bf16.mxu0 %v2608
        %2890 = vmatmul.mubr.bf16.gmra.mrb[0].mxu0 %v2300
        %v2891 = vpop.f32.mrb[0].mxu0
        %v2892 = vadd.f32 %v2647, %v2891
        %v2893 = vpop.f32.mrb[0].mxu0
        %v2894 = vpop.f32.mrb[0].mxu0
        %v2895 = vadd.f32 %v2647, %v2894
        %v2896 = vpop.f32.mrb[0].mxu0
        %2897 = vmatprep.mubr.bf16.mxu0 %v2609
        %2898 = vmatmul.mubr.bf16.gmra.mrb[0].mxu0 %v2301
        %v2899 = vpop.f32.mrb[0].mxu0
        %v2900 = vadd.f32 %v2647, %v2899
        %v2901 = vpop.f32.mrb[0].mxu0
        %v2902 = vpop.f32.mrb[0].mxu0
        %v2903 = vadd.f32 %v2647, %v2902
        %v2904 = vpop.f32.mrb[0].mxu0
        %2905 = vdwg.mxu0
        %2906 = vst [vmem:[%s511] sm:$0xff] %v2780
        %2907 = vst [vmem:[%s511 + $0x8] sm:$0xff] %v2783
        %2908 = vst [vmem:[%s511 + $0x10] sm:$0xff] %v2788
        %2909 = vst [vmem:[%s511 + $0x18] sm:$0xff] %v2791
        %2910 = vst [vmem:[%s511 + $0x20] sm:$0xff] %v2796
        %2911 = vst [vmem:[%s511 + $0x28] sm:$0xff] %v2799
        %2912 = vst [vmem:[%s511 + $0x30] sm:$0xff] %v2804
        %2913 = vst [vmem:[%s511 + $0x38] sm:$0xff] %v2807
        %2914 = vst [vmem:[%s511 + $0x40] sm:$0xff] %v2812
        %2915 = vst [vmem:[%s511 + $0x48] sm:$0xff] %v2815
        %2916 = vst [vmem:[%s511 + $0x50] sm:$0xff] %v2820
        %2917 = vst [vmem:[%s511 + $0x58] sm:$0xff] %v2823
        %2918 = vst [vmem:[%s511 + $0x60] sm:$0xff] %v2828
        %2919 = vst [vmem:[%s511 + $0x68] sm:$0xff] %v2831
        %2920 = vst [vmem:[%s511 + $0x70] sm:$0xff] %v2836
        %2921 = vst [vmem:[%s511 + $0x78] sm:$0xff] %v2839
        %2922 = vst [vmem:[%s511 + $0x80] sm:$0xff] %v2844
        %2923 = vst [vmem:[%s511 + $0x88] sm:$0xff] %v2847
        %2924 = vst [vmem:[%s511 + $0x90] sm:$0xff] %v2852
        %2925 = vst [vmem:[%s511 + $0x98] sm:$0xff] %v2855
        %2926 = vst [vmem:[%s511 + $0xa0] sm:$0xff] %v2860
        %2927 = vst [vmem:[%s511 + $0xa8] sm:$0xff] %v2863
        %2928 = vst [vmem:[%s511 + $0xb0] sm:$0xff] %v2868
        %2929 = vst [vmem:[%s511 + $0xb8] sm:$0xff] %v2871
        %2930 = vst [vmem:[%s511 + $0xc0] sm:$0xff] %v2876
        %2931 = vst [vmem:[%s511 + $0xc8] sm:$0xff] %v2879
        %2932 = vst [vmem:[%s511 + $0xd0] sm:$0xff] %v2884
        %2933 = vst [vmem:[%s511 + $0xd8] sm:$0xff] %v2887
        %2934 = vst [vmem:[%s511 + $0xe0] sm:$0xff] %v2892
        %2935 = vst [vmem:[%s511 + $0xe8] sm:$0xff] %v2895
        %2936 = vst [vmem:[%s511 + $0xf0] sm:$0xff] %v2900
        %2937 = vst [vmem:[%s511 + $0xf8] sm:$0xff] %v2903
        %s2938 = sand.u32 %s244, 1
        %s2939 = scalar_lea.sflag [#allocation4], %s2938
        %s2940 = sand.u32 %s244, 1
        %s2941 = smul.addr %s2940, 256
        %s2942 = scalar_lea.vmem [#allocation17], %s2941
        // Predicated region
        $region93: #{sage_forward.1} parent=55 // pred_check
          %p2943 = pneg %p254
        $region94: #{sage_forward.1} parent=55 // pred_check_branch
          %2945 = sbr.rel (%p2943) target = $region96
        $region95: #{sage_forward.1} parent=55 // pred_region
          %s2946 = smul.u32 4, %s32
          %s2948 = ssub.s32 4096, 4096
          %2949 = vsyncadd %s2939, %s2948
          %s2950 = smul.addr %s2946, 8
          %s2951 = smul.addr %s2950, 128
          %s2952 = scalar_lea.hbm %s9, %s2951
          %s2953 = sshll.u32 %s2942, 4
          %s2954 = int_to_ptr.vmem [resolvable:$true] %s2953
          %2959 = dma.vmem_to_hbm [thread:$0]  %s2954, 4096, %s2952, %s2939, 128, 128, 8
        $region96: #{sage_forward.1} parent=55 // pred_fallthru
          _
      $region56: #{sage_forward.1} parent=5 // pred_fallthru
        _
      %p2960 = scmp.le.s32.totalorder 2, %s27
      // Predicated region
      $region97: #{sage_forward.1} parent=5 // pred_check
        %p2961 = pneg %p2960
      $region98: #{sage_forward.1} parent=5 // pred_check_branch
        %2963 = sbr.rel (%p2961) target = $region100
      $region99: #{sage_forward.1} parent=5 // pred_region
        %s2964 = ssub.s32 %s27, 2
        // Predicated region
        $region101: #{sage_forward.1} parent=99 // pred_check
          %p2965 = pneg %p260
        $region102: #{sage_forward.1} parent=99 // pred_check_branch
          %2967 = sbr.rel (%p2965) target = $region104
        $region103: #{sage_forward.1} parent=99 // pred_region
          %s2968 = sand.u32 %s245, 1
          %s2969 = scalar_lea.sflag [#allocation4], %s2968
          %s2970 = sand.u32 %s245, 1
          %s2971 = smul.addr %s2970, 256
          %s2972 = scalar_lea.vmem [#allocation17], %s2971
          %2973 = dma.done %s2969, 4096
        $region104: #{sage_forward.1} parent=99 // pred_fallthru
          _
      $region100: #{sage_forward.1} parent=5 // pred_fallthru
        _
    $region6: #{sage_forward.1} parent=1 // loop_footer
      %s31 = sadd.s32 1, %s27
    $region7: #{sage_forward.1} parent=1 // loop_footer_branch
      %26 = sbr.rel target = $region3
    $region8: #{sage_forward.1} parent=1 // loop_exit
      _
    %2974 = vsyncpa [#allocation3], 1
    %s2975 = scalar_lea.sflag [#allocation3], 1
    %2976 = vsyncpa %s2975, 1
    %2977 = vsyncpa [#allocation6], 1
    %s2978 = scalar_lea.sflag [#allocation6], 1
    %2979 = vsyncpa %s2978, 1
    %2980 = vsyncpa [#allocation9], 1
    %2981 = vsyncpa [#allocation12], 1
    %2982 = vsyncpa [#allocation15], 1
    %2983 = vsyncpa [#allocation4], 1
    %s2984 = scalar_lea.sflag [#allocation4], 1
    %2985 = vsyncpa %s2984, 1

</llo_original>
